<compile_context>
chip_gen: v7x
topology: tpu7x:2x2x1
jax: 0.10.0
libtpu: 0.0.40
codegen_flags: <defaults>
</compile_context>

<pallas_src>
import jax
import jax.numpy as jnp
from jax import lax
from jax.experimental import pallas as pl
from jax.experimental.pallas import tpu as pltpu

BN_EPS = 1e-5
NC_PAD = 128  # lane-dense classifier head width


def _conv_bn_relu(h, w_ref, g_ref, be_ref, *, ksize, lout_p, lout_t):
    """h: (N, Lp_in, Cin) f32 value.  w_ref: (ksize*Cin, Cout) bf16 Ref.

    Returns (N, lout_p, Cout) f32; positions >= lout_t hold per-channel
    constants that are ignored by downstream masked statistics.
    """
    n = h.shape[0]
    cout = w_ref.shape[-1]

    # im2col: one sublane-shifted slice per tap, concatenated on the lane axis.
    # Slices are taken in f32 (plain sublane shifts), then cast once for the MXU.
    xcol = jnp.concatenate([h[:, k:k + lout_p, :] for k in range(ksize)], axis=-1)

    acc = lax.dot_general(                       # one MXU matmul per layer
        xcol.astype(jnp.bfloat16), w_ref[...],
        dimension_numbers=(((2,), (0,)), ((), ())),
        preferred_element_type=jnp.float32)      # (N, lout_p, Cout) f32

    # Zero the padded tail so it cannot pollute the batch statistics.
    if lout_p != lout_t:
        pos = lax.broadcasted_iota(jnp.int32, (1, lout_p, 1), 1)
        acc = jnp.where(pos < lout_t, acc, 0.0)

    # One-pass BatchNorm (training mode: biased batch stats) with folded affine.
    inv_cnt = 1.0 / float(n * lout_t)
    mean = jnp.sum(acc, axis=(0, 1), keepdims=True) * inv_cnt
    ex2 = jnp.sum(acc * acc, axis=(0, 1), keepdims=True) * inv_cnt
    var = jnp.maximum(ex2 - mean * mean, 0.0)
    scale = g_ref[...].reshape(1, 1, cout) * lax.rsqrt(var + BN_EPS)
    shift = be_ref[...].reshape(1, 1, cout) - mean * scale
    return jnp.maximum(acc * scale + shift, 0.0)


def _make_kernel(louts_p, louts_t):
    lp1, lp2, lp3 = louts_p
    lt1, lt2, lt3 = louts_t

    def kernel(x_ref,
               w1_ref, g1_ref, be1_ref,
               w2_ref, g2_ref, be2_ref,
               w3_ref, g3_ref, be3_ref,
               wfc_ref, bfc_ref,
               out_ref):
        h = x_ref[...]                                            # (N, Lpad, Cin) f32
        h = _conv_bn_relu(h, w1_ref, g1_ref, be1_ref, ksize=8, lout_p=lp1, lout_t=lt1)
        h = _conv_bn_relu(h, w2_ref, g2_ref, be2_ref, ksize=5, lout_p=lp2, lout_t=lt2)
        h = _conv_bn_relu(h, w3_ref, g3_ref, be3_ref, ksize=3, lout_p=lp3, lout_t=lt3)

        # Global average pool over the true (unpadded) length only.
        pos = lax.broadcasted_iota(jnp.int32, (1, lp3, 1), 1)
        pooled = jnp.sum(jnp.where(pos < lt3, h, 0.0), axis=1) * (1.0 / float(lt3))

        logits = jnp.dot(pooled.astype(jnp.bfloat16), wfc_ref[...],
                         preferred_element_type=jnp.float32) + bfc_ref[...]
        out_ref[...] = logits.astype(out_ref.dtype)               # (N, 128)

    return kernel


def _ceil8(v):
    return (v + 7) // 8 * 8


def _padded_lengths(l):
    """True and (8,)-aligned padded Lout for the three valid convolutions."""
    lt1, lt2, lt3 = l - 7, l - 11, l - 13
    assert lt3 >= 1, "sequence too short for the three valid convolutions"
    lp3 = _ceil8(lt3)
    lp2 = _ceil8(max(lt2, lp3 + 2))   # layer-3 slices need lp2 >= lp3 + 2
    lp1 = _ceil8(max(lt1, lp2 + 4))   # layer-2 slices need lp1 >= lp2 + 4
    l_pad = _ceil8(max(l, lp1 + 7))   # layer-1 slices need L   >= lp1 + 7
    return l_pad, (lp1, lp2, lp3), (lt1, lt2, lt3)


def init_params(key, input_size, num_classes):
    ks = jax.random.split(key, 5)

    def unif(k, shape, fan_in):
        bound = 1.0 / jnp.sqrt(fan_in)
        return jax.random.uniform(k, shape, jnp.float32, -bound, bound)

    # Conv weights are stored pre-flattened for im2col: row index = k*Cin + c,
    # matching xcol[..., k*Cin + c] = x[..., l+k, c].  Conv biases are omitted:
    # training-mode BatchNorm cancels them exactly in the forward output.
    w1 = unif(ks[0], (8 * input_size, 128), input_size * 8)
    w2 = unif(ks[1], (5 * 128, 256), 128 * 5)
    w3 = unif(ks[2], (3 * 256, 128), 256 * 3)
    wfc = unif(ks[3], (128, num_classes), 128)
    bfc = unif(ks[4], (1, num_classes), 128)

    # Lane-dense classifier head: pad num_classes -> 128 (sliced back later).
    wfc_p = jnp.zeros((128, NC_PAD), jnp.float32).at[:, :num_classes].set(wfc)
    bfc_p = jnp.zeros((1, NC_PAD), jnp.float32).at[:, :num_classes].set(bfc)

    return {
        "w1": w1.astype(jnp.bfloat16),
        "g1": jnp.ones((1, 128), jnp.float32), "be1": jnp.zeros((1, 128), jnp.float32),
        "w2": w2.astype(jnp.bfloat16),
        "g2": jnp.ones((1, 256), jnp.float32), "be2": jnp.zeros((1, 256), jnp.float32),
        "w3": w3.astype(jnp.bfloat16),
        "g3": jnp.ones((1, 128), jnp.float32), "be3": jnp.zeros((1, 128), jnp.float32),
        "wfc": wfc_p.astype(jnp.bfloat16),
        "bfc": bfc_p,
    }


def fcn_forward(x_ncl, params, num_classes):
    """x_ncl: (N, C_in, L) float32, same layout as the PyTorch module."""
    n, _, l = x_ncl.shape
    l_pad, louts_p, louts_t = _padded_lengths(l)

    # NCL -> NLC once, plus a single zero-pad of L so every Lout is 8-aligned.
    # TODO(synk): for large inputs fold this layout change into the kernel
    # (strided DMA / in-kernel transpose) to avoid one HBM round-trip.
    x = jnp.transpose(x_ncl, (0, 2, 1)).astype(jnp.float32)
    x = jnp.pad(x, ((0, 0), (0, l_pad - l), (0, 0)))

    args = [x,
            params["w1"], params["g1"], params["be1"],
            params["w2"], params["g2"], params["be2"],
            params["w3"], params["g3"], params["be3"],
            params["wfc"], params["bfc"]]

    vmem = pl.BlockSpec(memory_space=pltpu.MemorySpace.VMEM)
    # TODO(synk): for large N, add a batch grid axis with
    # dimension_semantics=("parallel",) and two-stage BN partials so both v7x
    # TensorCores are used and VMEM stays within the 64 MiB v7x budget.
    out_padded = pl.pallas_call(
        _make_kernel(louts_p, louts_t),
        out_shape=jax.ShapeDtypeStruct((n, NC_PAD), jnp.float32),
        in_specs=[vmem] * len(args),
        out_specs=vmem,
        compiler_params=pltpu.CompilerParams(vmem_limit_bytes=64 * 1024 * 1024),
    )(*args)
    return out_padded[:, :num_classes]


if __name__ == "__main__":
    key = jax.random.PRNGKey(0)
    k_x, k_p = jax.random.split(key)

    batch, input_size, length, num_classes = 2, 4, 32, 10
    x = jax.random.normal(k_x, (batch, input_size, length), jnp.float32)
    params = init_params(k_p, input_size, num_classes)

    out = fcn_forward(x, params, num_classes)
    out = jax.block_until_ready(out)
    assert out.shape == (batch, num_classes)
    print("KERNEL_OK")
</pallas_src>

<mosaic_0001>
module attributes {stable_mosaic.version = 11 : i64} {
  func.func @kernel(%arg0: memref<2x48x4xf32, #tpu.memory_space<vmem>>, %arg1: memref<32x128xbf16, #tpu.memory_space<vmem>>, %arg2: memref<1x128xf32, #tpu.memory_space<vmem>>, %arg3: memref<1x128xf32, #tpu.memory_space<vmem>>, %arg4: memref<640x256xbf16, #tpu.memory_space<vmem>>, %arg5: memref<1x256xf32, #tpu.memory_space<vmem>>, %arg6: memref<1x256xf32, #tpu.memory_space<vmem>>, %arg7: memref<768x128xbf16, #tpu.memory_space<vmem>>, %arg8: memref<1x128xf32, #tpu.memory_space<vmem>>, %arg9: memref<1x128xf32, #tpu.memory_space<vmem>>, %arg10: memref<128x128xbf16, #tpu.memory_space<vmem>>, %arg11: memref<1x128xf32, #tpu.memory_space<vmem>>, %arg12: memref<2x128xf32, #tpu.memory_space<vmem>>) attributes {dimension_semantics = [], scalar_prefetch = 0 : i64, scratch_operands = 0 : i64, tpu.core_type = #tpu.core_type<tc>} {
    %c0 = arith.constant 0 : index
    %c0_0 = arith.constant 0 : index
    %c0_1 = arith.constant 0 : index
    %0 = vector.load %arg0[%c0, %c0_0, %c0_1] : memref<2x48x4xf32, #tpu.memory_space<vmem>>, vector<2x48x4xf32>
    %1 = vector.extract_strided_slice %0 {offsets = [0, 0, 0], sizes = [2, 40, 4], strides = [1, 1, 1]} : vector<2x48x4xf32> to vector<2x40x4xf32>
    %2 = vector.extract_strided_slice %0 {offsets = [0, 1, 0], sizes = [2, 40, 4], strides = [1, 1, 1]} : vector<2x48x4xf32> to vector<2x40x4xf32>
    %3 = vector.extract_strided_slice %0 {offsets = [0, 2, 0], sizes = [2, 40, 4], strides = [1, 1, 1]} : vector<2x48x4xf32> to vector<2x40x4xf32>
    %4 = vector.extract_strided_slice %0 {offsets = [0, 3, 0], sizes = [2, 40, 4], strides = [1, 1, 1]} : vector<2x48x4xf32> to vector<2x40x4xf32>
    %5 = vector.extract_strided_slice %0 {offsets = [0, 4, 0], sizes = [2, 40, 4], strides = [1, 1, 1]} : vector<2x48x4xf32> to vector<2x40x4xf32>
    %6 = vector.extract_strided_slice %0 {offsets = [0, 5, 0], sizes = [2, 40, 4], strides = [1, 1, 1]} : vector<2x48x4xf32> to vector<2x40x4xf32>
    %7 = vector.extract_strided_slice %0 {offsets = [0, 6, 0], sizes = [2, 40, 4], strides = [1, 1, 1]} : vector<2x48x4xf32> to vector<2x40x4xf32>
    %8 = vector.extract_strided_slice %0 {offsets = [0, 7, 0], sizes = [2, 40, 4], strides = [1, 1, 1]} : vector<2x48x4xf32> to vector<2x40x4xf32>
    %9 = tpu.concatenate %1, %2, %3, %4, %5, %6, %7, %8 in 2 : vector<2x40x4xf32>, vector<2x40x4xf32>, vector<2x40x4xf32>, vector<2x40x4xf32>, vector<2x40x4xf32>, vector<2x40x4xf32>, vector<2x40x4xf32>, vector<2x40x4xf32> -> vector<2x40x32xf32>
    %10 = arith.truncf %9 : vector<2x40x32xf32> to vector<2x40x32xbf16>
    %c0_2 = arith.constant 0 : index
    %c0_3 = arith.constant 0 : index
    %11 = vector.load %arg1[%c0_2, %c0_3] : memref<32x128xbf16, #tpu.memory_space<vmem>>, vector<32x128xbf16>
    %cst = arith.constant dense<0.000000e+00> : vector<2x40x128xf32>
    %12 = tpu.matmul %10, %11, %cst {dimension_numbers = #tpu.dot_dimension_numbers<[2], [0], [0, 1], [1], [0, 0, 0, 1, 1, 1], [], []>} : vector<2x40x32xbf16>, vector<32x128xbf16>, vector<2x40x128xf32> -> vector<2x40x128xf32>
    %13 = tpu.iota {dimensions = array<i32: 1>} : vector<1x40x1xi32>
    %c25_i32 = arith.constant 25 : i32
    %14 = vector.broadcast %c25_i32 : i32 to vector<1x40x1xi32>
    %15 = arith.cmpi slt, %13, %14 : vector<1x40x1xi32>
    %cst_4 = arith.constant 0.000000e+00 : f32
    %16 = vector.shape_cast %15 : vector<1x40x1xi1> to vector<1x40x1xi1>
    %17 = vector.broadcast %16 : vector<1x40x1xi1> to vector<2x40x128xi1>
    %18 = vector.broadcast %cst_4 : f32 to vector<2x40x128xf32>
    %19 = arith.select %17, %12, %18 : vector<2x40x128xi1>, vector<2x40x128xf32>
    %cst_5 = arith.constant dense<0.000000e+00> : vector<128xf32>
    %20 = vector.multi_reduction <add>, %19, %cst_5 [0, 1] : vector<2x40x128xf32> to vector<128xf32>
    %21 = vector.shape_cast %20 : vector<128xf32> to vector<1x1x128xf32>
    %cst_6 = arith.constant 2.000000e-02 : f32
    %22 = vector.broadcast %cst_6 : f32 to vector<1x1x128xf32>
    %23 = arith.mulf %21, %22 : vector<1x1x128xf32>
    %24 = arith.mulf %19, %19 : vector<2x40x128xf32>
    %cst_7 = arith.constant dense<0.000000e+00> : vector<128xf32>
    %25 = vector.multi_reduction <add>, %24, %cst_7 [0, 1] : vector<2x40x128xf32> to vector<128xf32>
    %26 = vector.shape_cast %25 : vector<128xf32> to vector<1x1x128xf32>
    %cst_8 = arith.constant 2.000000e-02 : f32
    %27 = vector.broadcast %cst_8 : f32 to vector<1x1x128xf32>
    %28 = arith.mulf %26, %27 : vector<1x1x128xf32>
    %29 = arith.mulf %23, %23 : vector<1x1x128xf32>
    %30 = arith.subf %28, %29 : vector<1x1x128xf32>
    %cst_9 = arith.constant 0.000000e+00 : f32
    %31 = vector.broadcast %cst_9 : f32 to vector<1x1x128xf32>
    %32 = arith.maximumf %30, %31 : vector<1x1x128xf32>
    %c0_10 = arith.constant 0 : index
    %c0_11 = arith.constant 0 : index
    %33 = vector.load %arg2[%c0_10, %c0_11] : memref<1x128xf32, #tpu.memory_space<vmem>>, vector<1x128xf32>
    %34 = vector.shape_cast %33 : vector<1x128xf32> to vector<1x1x128xf32>
    %cst_12 = arith.constant 9.99999974E-6 : f32
    %35 = vector.broadcast %cst_12 : f32 to vector<1x1x128xf32>
    %36 = arith.addf %32, %35 : vector<1x1x128xf32>
    %37 = math.rsqrt %36 : vector<1x1x128xf32>
    %38 = arith.mulf %34, %37 : vector<1x1x128xf32>
    %c0_13 = arith.constant 0 : index
    %c0_14 = arith.constant 0 : index
    %39 = vector.load %arg3[%c0_13, %c0_14] : memref<1x128xf32, #tpu.memory_space<vmem>>, vector<1x128xf32>
    %40 = vector.shape_cast %39 : vector<1x128xf32> to vector<1x1x128xf32>
    %41 = arith.mulf %23, %38 : vector<1x1x128xf32>
    %42 = arith.subf %40, %41 : vector<1x1x128xf32>
    %43 = vector.broadcast %38 : vector<1x1x128xf32> to vector<2x40x128xf32>
    %44 = arith.mulf %19, %43 : vector<2x40x128xf32>
    %45 = vector.broadcast %42 : vector<1x1x128xf32> to vector<2x40x128xf32>
    %46 = arith.addf %44, %45 : vector<2x40x128xf32>
    %cst_15 = arith.constant 0.000000e+00 : f32
    %47 = vector.broadcast %cst_15 : f32 to vector<2x40x128xf32>
    %48 = arith.maximumf %46, %47 : vector<2x40x128xf32>
    %49 = vector.extract_strided_slice %48 {offsets = [0, 0, 0], sizes = [2, 32, 128], strides = [1, 1, 1]} : vector<2x40x128xf32> to vector<2x32x128xf32>
    %50 = vector.extract_strided_slice %48 {offsets = [0, 1, 0], sizes = [2, 32, 128], strides = [1, 1, 1]} : vector<2x40x128xf32> to vector<2x32x128xf32>
    %51 = vector.extract_strided_slice %48 {offsets = [0, 2, 0], sizes = [2, 32, 128], strides = [1, 1, 1]} : vector<2x40x128xf32> to vector<2x32x128xf32>
    %52 = vector.extract_strided_slice %48 {offsets = [0, 3, 0], sizes = [2, 32, 128], strides = [1, 1, 1]} : vector<2x40x128xf32> to vector<2x32x128xf32>
    %53 = vector.extract_strided_slice %48 {offsets = [0, 4, 0], sizes = [2, 32, 128], strides = [1, 1, 1]} : vector<2x40x128xf32> to vector<2x32x128xf32>
    %54 = tpu.concatenate %49, %50, %51, %52, %53 in 2 : vector<2x32x128xf32>, vector<2x32x128xf32>, vector<2x32x128xf32>, vector<2x32x128xf32>, vector<2x32x128xf32> -> vector<2x32x640xf32>
    %55 = arith.truncf %54 : vector<2x32x640xf32> to vector<2x32x640xbf16>
    %c0_16 = arith.constant 0 : index
    %c0_17 = arith.constant 0 : index
    %56 = vector.load %arg4[%c0_16, %c0_17] : memref<640x256xbf16, #tpu.memory_space<vmem>>, vector<640x256xbf16>
    %cst_18 = arith.constant dense<0.000000e+00> : vector<2x32x256xf32>
    %57 = tpu.matmul %55, %56, %cst_18 {dimension_numbers = #tpu.dot_dimension_numbers<[2], [0], [0, 1], [1], [0, 0, 0, 1, 1, 1], [], []>} : vector<2x32x640xbf16>, vector<640x256xbf16>, vector<2x32x256xf32> -> vector<2x32x256xf32>
    %58 = tpu.iota {dimensions = array<i32: 1>} : vector<1x32x1xi32>
    %c21_i32 = arith.constant 21 : i32
    %59 = vector.broadcast %c21_i32 : i32 to vector<1x32x1xi32>
    %60 = arith.cmpi slt, %58, %59 : vector<1x32x1xi32>
    %cst_19 = arith.constant 0.000000e+00 : f32
    %61 = vector.shape_cast %60 : vector<1x32x1xi1> to vector<1x32x1xi1>
    %62 = vector.broadcast %61 : vector<1x32x1xi1> to vector<2x32x256xi1>
    %63 = vector.broadcast %cst_19 : f32 to vector<2x32x256xf32>
    %64 = arith.select %62, %57, %63 : vector<2x32x256xi1>, vector<2x32x256xf32>
    %cst_20 = arith.constant dense<0.000000e+00> : vector<256xf32>
    %65 = vector.multi_reduction <add>, %64, %cst_20 [0, 1] : vector<2x32x256xf32> to vector<256xf32>
    %66 = vector.shape_cast %65 : vector<256xf32> to vector<1x1x256xf32>
    %cst_21 = arith.constant 0.0238095243 : f32
    %67 = vector.broadcast %cst_21 : f32 to vector<1x1x256xf32>
    %68 = arith.mulf %66, %67 : vector<1x1x256xf32>
    %69 = arith.mulf %64, %64 : vector<2x32x256xf32>
    %cst_22 = arith.constant dense<0.000000e+00> : vector<256xf32>
    %70 = vector.multi_reduction <add>, %69, %cst_22 [0, 1] : vector<2x32x256xf32> to vector<256xf32>
    %71 = vector.shape_cast %70 : vector<256xf32> to vector<1x1x256xf32>
    %cst_23 = arith.constant 0.0238095243 : f32
    %72 = vector.broadcast %cst_23 : f32 to vector<1x1x256xf32>
    %73 = arith.mulf %71, %72 : vector<1x1x256xf32>
    %74 = arith.mulf %68, %68 : vector<1x1x256xf32>
    %75 = arith.subf %73, %74 : vector<1x1x256xf32>
    %cst_24 = arith.constant 0.000000e+00 : f32
    %76 = vector.broadcast %cst_24 : f32 to vector<1x1x256xf32>
    %77 = arith.maximumf %75, %76 : vector<1x1x256xf32>
    %c0_25 = arith.constant 0 : index
    %c0_26 = arith.constant 0 : index
    %78 = vector.load %arg5[%c0_25, %c0_26] : memref<1x256xf32, #tpu.memory_space<vmem>>, vector<1x256xf32>
    %79 = vector.shape_cast %78 : vector<1x256xf32> to vector<1x1x256xf32>
    %cst_27 = arith.constant 9.99999974E-6 : f32
    %80 = vector.broadcast %cst_27 : f32 to vector<1x1x256xf32>
    %81 = arith.addf %77, %80 : vector<1x1x256xf32>
    %82 = math.rsqrt %81 : vector<1x1x256xf32>
    %83 = arith.mulf %79, %82 : vector<1x1x256xf32>
    %c0_28 = arith.constant 0 : index
    %c0_29 = arith.constant 0 : index
    %84 = vector.load %arg6[%c0_28, %c0_29] : memref<1x256xf32, #tpu.memory_space<vmem>>, vector<1x256xf32>
    %85 = vector.shape_cast %84 : vector<1x256xf32> to vector<1x1x256xf32>
    %86 = arith.mulf %68, %83 : vector<1x1x256xf32>
    %87 = arith.subf %85, %86 : vector<1x1x256xf32>
    %88 = vector.broadcast %83 : vector<1x1x256xf32> to vector<2x32x256xf32>
    %89 = arith.mulf %64, %88 : vector<2x32x256xf32>
    %90 = vector.broadcast %87 : vector<1x1x256xf32> to vector<2x32x256xf32>
    %91 = arith.addf %89, %90 : vector<2x32x256xf32>
    %cst_30 = arith.constant 0.000000e+00 : f32
    %92 = vector.broadcast %cst_30 : f32 to vector<2x32x256xf32>
    %93 = arith.maximumf %91, %92 : vector<2x32x256xf32>
    %94 = vector.extract_strided_slice %93 {offsets = [0, 0, 0], sizes = [2, 24, 256], strides = [1, 1, 1]} : vector<2x32x256xf32> to vector<2x24x256xf32>
    %95 = vector.extract_strided_slice %93 {offsets = [0, 1, 0], sizes = [2, 24, 256], strides = [1, 1, 1]} : vector<2x32x256xf32> to vector<2x24x256xf32>
    %96 = vector.extract_strided_slice %93 {offsets = [0, 2, 0], sizes = [2, 24, 256], strides = [1, 1, 1]} : vector<2x32x256xf32> to vector<2x24x256xf32>
    %97 = tpu.concatenate %94, %95, %96 in 2 : vector<2x24x256xf32>, vector<2x24x256xf32>, vector<2x24x256xf32> -> vector<2x24x768xf32>
    %98 = arith.truncf %97 : vector<2x24x768xf32> to vector<2x24x768xbf16>
    %c0_31 = arith.constant 0 : index
    %c0_32 = arith.constant 0 : index
    %99 = vector.load %arg7[%c0_31, %c0_32] : memref<768x128xbf16, #tpu.memory_space<vmem>>, vector<768x128xbf16>
    %cst_33 = arith.constant dense<0.000000e+00> : vector<2x24x128xf32>
    %100 = tpu.matmul %98, %99, %cst_33 {dimension_numbers = #tpu.dot_dimension_numbers<[2], [0], [0, 1], [1], [0, 0, 0, 1, 1, 1], [], []>} : vector<2x24x768xbf16>, vector<768x128xbf16>, vector<2x24x128xf32> -> vector<2x24x128xf32>
    %101 = tpu.iota {dimensions = array<i32: 1>} : vector<1x24x1xi32>
    %c19_i32 = arith.constant 19 : i32
    %102 = vector.broadcast %c19_i32 : i32 to vector<1x24x1xi32>
    %103 = arith.cmpi slt, %101, %102 : vector<1x24x1xi32>
    %cst_34 = arith.constant 0.000000e+00 : f32
    %104 = vector.shape_cast %103 : vector<1x24x1xi1> to vector<1x24x1xi1>
    %105 = vector.broadcast %104 : vector<1x24x1xi1> to vector<2x24x128xi1>
    %106 = vector.broadcast %cst_34 : f32 to vector<2x24x128xf32>
    %107 = arith.select %105, %100, %106 : vector<2x24x128xi1>, vector<2x24x128xf32>
    %cst_35 = arith.constant dense<0.000000e+00> : vector<128xf32>
    %108 = vector.multi_reduction <add>, %107, %cst_35 [0, 1] : vector<2x24x128xf32> to vector<128xf32>
    %109 = vector.shape_cast %108 : vector<128xf32> to vector<1x1x128xf32>
    %cst_36 = arith.constant 0.0263157897 : f32
    %110 = vector.broadcast %cst_36 : f32 to vector<1x1x128xf32>
    %111 = arith.mulf %109, %110 : vector<1x1x128xf32>
    %112 = arith.mulf %107, %107 : vector<2x24x128xf32>
    %cst_37 = arith.constant dense<0.000000e+00> : vector<128xf32>
    %113 = vector.multi_reduction <add>, %112, %cst_37 [0, 1] : vector<2x24x128xf32> to vector<128xf32>
    %114 = vector.shape_cast %113 : vector<128xf32> to vector<1x1x128xf32>
    %cst_38 = arith.constant 0.0263157897 : f32
    %115 = vector.broadcast %cst_38 : f32 to vector<1x1x128xf32>
    %116 = arith.mulf %114, %115 : vector<1x1x128xf32>
    %117 = arith.mulf %111, %111 : vector<1x1x128xf32>
    %118 = arith.subf %116, %117 : vector<1x1x128xf32>
    %cst_39 = arith.constant 0.000000e+00 : f32
    %119 = vector.broadcast %cst_39 : f32 to vector<1x1x128xf32>
    %120 = arith.maximumf %118, %119 : vector<1x1x128xf32>
    %c0_40 = arith.constant 0 : index
    %c0_41 = arith.constant 0 : index
    %121 = vector.load %arg8[%c0_40, %c0_41] : memref<1x128xf32, #tpu.memory_space<vmem>>, vector<1x128xf32>
    %122 = vector.shape_cast %121 : vector<1x128xf32> to vector<1x1x128xf32>
    %cst_42 = arith.constant 9.99999974E-6 : f32
    %123 = vector.broadcast %cst_42 : f32 to vector<1x1x128xf32>
    %124 = arith.addf %120, %123 : vector<1x1x128xf32>
    %125 = math.rsqrt %124 : vector<1x1x128xf32>
    %126 = arith.mulf %122, %125 : vector<1x1x128xf32>
    %c0_43 = arith.constant 0 : index
    %c0_44 = arith.constant 0 : index
    %127 = vector.load %arg9[%c0_43, %c0_44] : memref<1x128xf32, #tpu.memory_space<vmem>>, vector<1x128xf32>
    %128 = vector.shape_cast %127 : vector<1x128xf32> to vector<1x1x128xf32>
    %129 = arith.mulf %111, %126 : vector<1x1x128xf32>
    %130 = arith.subf %128, %129 : vector<1x1x128xf32>
    %131 = vector.broadcast %126 : vector<1x1x128xf32> to vector<2x24x128xf32>
    %132 = arith.mulf %107, %131 : vector<2x24x128xf32>
    %133 = vector.broadcast %130 : vector<1x1x128xf32> to vector<2x24x128xf32>
    %134 = arith.addf %132, %133 : vector<2x24x128xf32>
    %cst_45 = arith.constant 0.000000e+00 : f32
    %135 = vector.broadcast %cst_45 : f32 to vector<2x24x128xf32>
    %136 = arith.maximumf %134, %135 : vector<2x24x128xf32>
    %137 = tpu.iota {dimensions = array<i32: 1>} : vector<1x24x1xi32>
    %c19_i32_46 = arith.constant 19 : i32
    %138 = vector.broadcast %c19_i32_46 : i32 to vector<1x24x1xi32>
    %139 = arith.cmpi slt, %137, %138 : vector<1x24x1xi32>
    %cst_47 = arith.constant 0.000000e+00 : f32
    %140 = vector.shape_cast %139 : vector<1x24x1xi1> to vector<1x24x1xi1>
    %141 = vector.broadcast %140 : vector<1x24x1xi1> to vector<2x24x128xi1>
    %142 = vector.broadcast %cst_47 : f32 to vector<2x24x128xf32>
    %143 = arith.select %141, %136, %142 : vector<2x24x128xi1>, vector<2x24x128xf32>
    %cst_48 = arith.constant dense<0.000000e+00> : vector<2x128xf32>
    %144 = vector.multi_reduction <add>, %143, %cst_48 [1] : vector<2x24x128xf32> to vector<2x128xf32>
    %cst_49 = arith.constant 0.0526315793 : f32
    %145 = vector.broadcast %cst_49 : f32 to vector<2x128xf32>
    %146 = arith.mulf %144, %145 : vector<2x128xf32>
    %147 = arith.truncf %146 : vector<2x128xf32> to vector<2x128xbf16>
    %c0_50 = arith.constant 0 : index
    %c0_51 = arith.constant 0 : index
    %148 = vector.load %arg10[%c0_50, %c0_51] : memref<128x128xbf16, #tpu.memory_space<vmem>>, vector<128x128xbf16>
    %cst_52 = arith.constant dense<0.000000e+00> : vector<2x128xf32>
    %149 = tpu.matmul %147, %148, %cst_52 {dimension_numbers = #tpu.dot_dimension_numbers<[1], [0], [0], [1], [0, 0, 1, 1], [], []>} : vector<2x128xbf16>, vector<128x128xbf16>, vector<2x128xf32> -> vector<2x128xf32>
    %c0_53 = arith.constant 0 : index
    %c0_54 = arith.constant 0 : index
    %150 = vector.load %arg11[%c0_53, %c0_54] : memref<1x128xf32, #tpu.memory_space<vmem>>, vector<1x128xf32>
    %151 = vector.broadcast %150 : vector<1x128xf32> to vector<2x128xf32>
    %152 = arith.addf %149, %151 : vector<2x128xf32>
    %c0_55 = arith.constant 0 : index
    %c0_56 = arith.constant 0 : index
    %153 = vector.load %arg12[%c0_55, %c0_56] : memref<2x128xf32, #tpu.memory_space<vmem>>, vector<2x128xf32>
    tpu.vector_store %arg12[%c0_55, %c0_56], %152 {strides = array<i32>} : memref<2x128xf32, #tpu.memory_space<vmem>>, vector<2x128xf32>,
    return
  }
}

</mosaic_0001>

<llo_original>
// kernel: tpu_custom_call.1
$region0: #{tpu_custom_call.1}
  #allocation0 [shape = 'u32[]', space=smem, size = 0x4, offset = 0x4, fixed_abs, tag = 'smem constant byte address 0x4 - core index']
  #allocation1 [shape = 'u32[144,128]{1,0:T(1,128)}', space=vmem, size = 0x12000, scoped, tag = 'internal scratch']
  %s0 = inlined_call_operand.hbm [shape: f32[2,48,4], index: 0, kind: input, shape index: {}]
  %s1 = inlined_call_operand.hbm [shape: bf16[32,128], index: 1, kind: input, shape index: {}]
  %s2 = inlined_call_operand.hbm [shape: f32[1,128], index: 2, kind: input, shape index: {}]
  %s3 = inlined_call_operand.hbm [shape: f32[1,128], index: 3, kind: input, shape index: {}]
  %s4 = inlined_call_operand.hbm [shape: bf16[640,256], index: 4, kind: input, shape index: {}]
  %s5 = inlined_call_operand.hbm [shape: f32[1,256], index: 5, kind: input, shape index: {}]
  %s6 = inlined_call_operand.hbm [shape: f32[1,256], index: 6, kind: input, shape index: {}]
  %s7 = inlined_call_operand.hbm [shape: bf16[768,128], index: 7, kind: input, shape index: {}]
  %s8 = inlined_call_operand.hbm [shape: f32[1,128], index: 8, kind: input, shape index: {}]
  %s9 = inlined_call_operand.hbm [shape: f32[1,128], index: 9, kind: input, shape index: {}]
  %s10 = inlined_call_operand.hbm [shape: bf16[128,128], index: 10, kind: input, shape index: {}]
  %s11 = inlined_call_operand.hbm [shape: f32[1,128], index: 11, kind: input, shape index: {}]
  %s12 = inlined_call_operand.hbm [shape: f32[2,128], index: 12, kind: output, shape index: {}]
  %s13 = sld [smem:[#allocation0]]
  $region106: #{tpu_custom_call.1} parent=0
    _
  %s15 = ssub.s32 1, %s13
  %s16 = scalar_select 0, %s15, %s13
  $region1: #{tpu_custom_call.1} parent=0
    #allocation2 [shape = 'u8[49152]{0}', space=vmem, size = 0xc000, scoped, tag = 'input window, operand 0, single buffered']
    #allocation3 [shape = 's32[1]{0}', space=sflag, size = 0x4, scoped, tag = 'scoped memory for tpu_custom_call.1']
    #allocation4 [shape = 's32[1]{0}', space=sflag, size = 0x4, scoped, tag = 'scoped memory for tpu_custom_call.1']
    #allocation5 [shape = 'u8[8192]{0}', space=vmem, size = 0x2000, scoped, tag = 'input window, operand 1, single buffered']
    #allocation6 [shape = 's32[1]{0}', space=sflag, size = 0x4, scoped, tag = 'scoped memory for tpu_custom_call.1']
    #allocation7 [shape = 'u8[512]{0}', space=vmem, size = 0x400, scoped, tag = 'input window, operand 2, single buffered']
    #allocation8 [shape = 'u8[512]{0}', space=vmem, size = 0x400, scoped, tag = 'input window, operand 3, single buffered']
    #allocation9 [shape = 's32[1]{0}', space=sflag, size = 0x4, scoped, tag = 'scoped memory for tpu_custom_call.1']
    #allocation10 [shape = 'u8[327680]{0}', space=vmem, size = 0x50000, scoped, tag = 'input window, operand 4, single buffered']
    #allocation11 [shape = 'u8[1024]{0}', space=vmem, size = 0x400, scoped, tag = 'input window, operand 5, single buffered']
    #allocation12 [shape = 's32[1]{0}', space=sflag, size = 0x4, scoped, tag = 'scoped memory for tpu_custom_call.1']
    #allocation13 [shape = 'u8[1024]{0}', space=vmem, size = 0x400, scoped, tag = 'input window, operand 6, single buffered']
    #allocation14 [shape = 'u8[196608]{0}', space=vmem, size = 0x30000, scoped, tag = 'input window, operand 7, single buffered']
    #allocation15 [shape = 's32[1]{0}', space=sflag, size = 0x4, scoped, tag = 'scoped memory for tpu_custom_call.1']
    #allocation16 [shape = 'u8[512]{0}', space=vmem, size = 0x400, scoped, tag = 'input window, operand 8, single buffered']
    #allocation17 [shape = 'u8[512]{0}', space=vmem, size = 0x400, scoped, tag = 'input window, operand 9, single buffered']
    #allocation18 [shape = 's32[1]{0}', space=sflag, size = 0x4, scoped, tag = 'scoped memory for tpu_custom_call.1']
    #allocation19 [shape = 'u8[32768]{0}', space=vmem, size = 0x8000, scoped, tag = 'input window, operand 10, single buffered']
    #allocation20 [shape = 'u8[512]{0}', space=vmem, size = 0x400, scoped, tag = 'input window, operand 11, single buffered']
    #allocation21 [shape = 's32[1]{0}', space=sflag, size = 0x4, scoped, tag = 'scoped memory for tpu_custom_call.1']
    #allocation22 [shape = 'u8[1024]{0}', space=vmem, size = 0x400, scoped, tag = 'output window, operand 0, single buffered']
    %17 = vsyncpa [#allocation3], 0
    %18 = vsyncpa [#allocation6], 0
    %19 = vsyncpa [#allocation9], 0
    %20 = vsyncpa [#allocation12], 0
    %21 = vsyncpa [#allocation15], 0
    %22 = vsyncpa [#allocation18], 0
    %23 = vsyncpa [#allocation21], 0
    %24 = vsyncpa [#allocation4], 0
    // Predicated region
    $region2: #{tpu_custom_call.1} parent=1 // pred_check
      _
    $region3: #{tpu_custom_call.1} parent=1 // pred_check_branch
      %26 = sbr.rel (0) target = $region5
    $region4: #{tpu_custom_call.1} parent=1 // pred_region
      %s28 = ssub.s32 1536, 1536
      %29 = vsyncadd [#allocation3], %s28
      %s30 = sshll.u32 [#allocation2], 4
      %s31 = int_to_ptr.vmem [resolvable:$true] %s30
      %36 = dma.hbm_to_vmem [thread:$0]  %s0, 1536, %s31, [#allocation3], 128, 128, 8
    $region5: #{tpu_custom_call.1} parent=1 // pred_fallthru
      _
    // Predicated region
    $region6: #{tpu_custom_call.1} parent=1 // pred_check
      _
    $region7: #{tpu_custom_call.1} parent=1 // pred_check_branch
      %38 = sbr.rel (0) target = $region9
    $region8: #{tpu_custom_call.1} parent=1 // pred_region
      %s40 = ssub.s32 256, 256
      %41 = vsyncadd [#allocation6], %s40
      %s42 = sshll.u32 [#allocation5], 4
      %s43 = int_to_ptr.vmem [resolvable:$true] %s42
      %48 = dma.hbm_to_vmem [thread:$0]  %s1, 256, %s43, [#allocation6], 64, 64, 4
    $region9: #{tpu_custom_call.1} parent=1 // pred_fallthru
      _
    // Predicated region
    $region10: #{tpu_custom_call.1} parent=1 // pred_check
      _
    $region11: #{tpu_custom_call.1} parent=1 // pred_check_branch
      %50 = sbr.rel (0) target = $region13
    $region12: #{tpu_custom_call.1} parent=1 // pred_region
      %s52 = ssub.s32 16, 16
      %53 = vsyncadd [#allocation6], %s52
      %s55 = sshll.u32 [#allocation7], 4
      %s56 = int_to_ptr.vmem [resolvable:$true] %s55
      %58 = dma.hbm_to_vmem [thread:$0]  %s2, 16, %s56, [#allocation6]
    $region13: #{tpu_custom_call.1} parent=1 // pred_fallthru
      _
    // Predicated region
    $region14: #{tpu_custom_call.1} parent=1 // pred_check
      _
    $region15: #{tpu_custom_call.1} parent=1 // pred_check_branch
      %60 = sbr.rel (0) target = $region17
    $region16: #{tpu_custom_call.1} parent=1 // pred_region
      %s62 = ssub.s32 16, 16
      %63 = vsyncadd [#allocation9], %s62
      %s65 = sshll.u32 [#allocation8], 4
      %s66 = int_to_ptr.vmem [resolvable:$true] %s65
      %68 = dma.hbm_to_vmem [thread:$0]  %s3, 16, %s66, [#allocation9]
    $region17: #{tpu_custom_call.1} parent=1 // pred_fallthru
      _
    // Predicated region
    $region18: #{tpu_custom_call.1} parent=1 // pred_check
      _
    $region19: #{tpu_custom_call.1} parent=1 // pred_check_branch
      %70 = sbr.rel (0) target = $region21
    $region20: #{tpu_custom_call.1} parent=1 // pred_region
      %s72 = ssub.s32 10240, 10240
      %73 = vsyncadd [#allocation9], %s72
      %s74 = sshll.u32 [#allocation10], 4
      %s75 = int_to_ptr.vmem [resolvable:$true] %s74
      %80 = dma.hbm_to_vmem [thread:$0]  %s4, 10240, %s75, [#allocation9], 128, 128, 8
    $region21: #{tpu_custom_call.1} parent=1 // pred_fallthru
      _
    // Predicated region
    $region22: #{tpu_custom_call.1} parent=1 // pred_check
      _
    $region23: #{tpu_custom_call.1} parent=1 // pred_check_branch
      %82 = sbr.rel (0) target = $region25
    $region24: #{tpu_custom_call.1} parent=1 // pred_region
      %s84 = ssub.s32 32, 32
      %85 = vsyncadd [#allocation12], %s84
      %s87 = sshll.u32 [#allocation11], 4
      %s88 = int_to_ptr.vmem [resolvable:$true] %s87
      %90 = dma.hbm_to_vmem [thread:$0]  %s5, 32, %s88, [#allocation12]
    $region25: #{tpu_custom_call.1} parent=1 // pred_fallthru
      _
    // Predicated region
    $region26: #{tpu_custom_call.1} parent=1 // pred_check
      _
    $region27: #{tpu_custom_call.1} parent=1 // pred_check_branch
      %92 = sbr.rel (0) target = $region29
    $region28: #{tpu_custom_call.1} parent=1 // pred_region
      %s94 = ssub.s32 32, 32
      %95 = vsyncadd [#allocation12], %s94
      %s97 = sshll.u32 [#allocation13], 4
      %s98 = int_to_ptr.vmem [resolvable:$true] %s97
      %100 = dma.hbm_to_vmem [thread:$0]  %s6, 32, %s98, [#allocation12]
    $region29: #{tpu_custom_call.1} parent=1 // pred_fallthru
      _
    // Predicated region
    $region30: #{tpu_custom_call.1} parent=1 // pred_check
      _
    $region31: #{tpu_custom_call.1} parent=1 // pred_check_branch
      %102 = sbr.rel (0) target = $region33
    $region32: #{tpu_custom_call.1} parent=1 // pred_region
      %s104 = ssub.s32 6144, 6144
      %105 = vsyncadd [#allocation15], %s104
      %s106 = sshll.u32 [#allocation14], 4
      %s107 = int_to_ptr.vmem [resolvable:$true] %s106
      %112 = dma.hbm_to_vmem [thread:$0]  %s7, 6144, %s107, [#allocation15], 64, 64, 4
    $region33: #{tpu_custom_call.1} parent=1 // pred_fallthru
      _
    // Predicated region
    $region34: #{tpu_custom_call.1} parent=1 // pred_check
      _
    $region35: #{tpu_custom_call.1} parent=1 // pred_check_branch
      %114 = sbr.rel (0) target = $region37
    $region36: #{tpu_custom_call.1} parent=1 // pred_region
      %s116 = ssub.s32 16, 16
      %117 = vsyncadd [#allocation15], %s116
      %s119 = sshll.u32 [#allocation16], 4
      %s120 = int_to_ptr.vmem [resolvable:$true] %s119
      %122 = dma.hbm_to_vmem [thread:$0]  %s8, 16, %s120, [#allocation15]
    $region37: #{tpu_custom_call.1} parent=1 // pred_fallthru
      _
    // Predicated region
    $region38: #{tpu_custom_call.1} parent=1 // pred_check
      _
    $region39: #{tpu_custom_call.1} parent=1 // pred_check_branch
      %124 = sbr.rel (0) target = $region41
    $region40: #{tpu_custom_call.1} parent=1 // pred_region
      %s126 = ssub.s32 16, 16
      %127 = vsyncadd [#allocation18], %s126
      %s129 = sshll.u32 [#allocation17], 4
      %s130 = int_to_ptr.vmem [resolvable:$true] %s129
      %132 = dma.hbm_to_vmem [thread:$0]  %s9, 16, %s130, [#allocation18]
    $region41: #{tpu_custom_call.1} parent=1 // pred_fallthru
      _
    // Predicated region
    $region42: #{tpu_custom_call.1} parent=1 // pred_check
      _
    $region43: #{tpu_custom_call.1} parent=1 // pred_check_branch
      %134 = sbr.rel (0) target = $region45
    $region44: #{tpu_custom_call.1} parent=1 // pred_region
      %s136 = ssub.s32 1024, 1024
      %137 = vsyncadd [#allocation18], %s136
      %s138 = sshll.u32 [#allocation19], 4
      %s139 = int_to_ptr.vmem [resolvable:$true] %s138
      %144 = dma.hbm_to_vmem [thread:$0]  %s10, 1024, %s139, [#allocation18], 64, 64, 4
    $region45: #{tpu_custom_call.1} parent=1 // pred_fallthru
      _
    // Predicated region
    $region46: #{tpu_custom_call.1} parent=1 // pred_check
      _
    $region47: #{tpu_custom_call.1} parent=1 // pred_check_branch
      %146 = sbr.rel (0) target = $region49
    $region48: #{tpu_custom_call.1} parent=1 // pred_region
      %s148 = ssub.s32 16, 16
      %149 = vsyncadd [#allocation21], %s148
      %s151 = sshll.u32 [#allocation20], 4
      %s152 = int_to_ptr.vmem [resolvable:$true] %s151
      %154 = dma.hbm_to_vmem [thread:$0]  %s11, 16, %s152, [#allocation21]
    $region49: #{tpu_custom_call.1} parent=1 // pred_fallthru
      _
    // Predicated region
    $region50: #{tpu_custom_call.1} parent=1 // pred_check
      _
    $region51: #{tpu_custom_call.1} parent=1 // pred_check_branch
      %156 = sbr.rel (0) target = $region53
    $region52: #{tpu_custom_call.1} parent=1 // pred_region
      %157 = dma.done [#allocation3], 1536
    $region53: #{tpu_custom_call.1} parent=1 // pred_fallthru
      _
    // Predicated region
    $region54: #{tpu_custom_call.1} parent=1 // pred_check
      _
    $region55: #{tpu_custom_call.1} parent=1 // pred_check_branch
      %159 = sbr.rel (0) target = $region57
    $region56: #{tpu_custom_call.1} parent=1 // pred_region
      %160 = dma.done [#allocation6], 256
    $region57: #{tpu_custom_call.1} parent=1 // pred_fallthru
      _
    // Predicated region
    $region58: #{tpu_custom_call.1} parent=1 // pred_check
      _
    $region59: #{tpu_custom_call.1} parent=1 // pred_check_branch
      %162 = sbr.rel (0) target = $region61
    $region60: #{tpu_custom_call.1} parent=1 // pred_region
      %163 = dma.done [#allocation6], 16
    $region61: #{tpu_custom_call.1} parent=1 // pred_fallthru
      _
    // Predicated region
    $region62: #{tpu_custom_call.1} parent=1 // pred_check
      _
    $region63: #{tpu_custom_call.1} parent=1 // pred_check_branch
      %165 = sbr.rel (0) target = $region65
    $region64: #{tpu_custom_call.1} parent=1 // pred_region
      %166 = dma.done [#allocation9], 16
    $region65: #{tpu_custom_call.1} parent=1 // pred_fallthru
      _
    // Predicated region
    $region66: #{tpu_custom_call.1} parent=1 // pred_check
      _
    $region67: #{tpu_custom_call.1} parent=1 // pred_check_branch
      %168 = sbr.rel (0) target = $region69
    $region68: #{tpu_custom_call.1} parent=1 // pred_region
      %169 = dma.done [#allocation9], 10240
    $region69: #{tpu_custom_call.1} parent=1 // pred_fallthru
      _
    // Predicated region
    $region70: #{tpu_custom_call.1} parent=1 // pred_check
      _
    $region71: #{tpu_custom_call.1} parent=1 // pred_check_branch
      %171 = sbr.rel (0) target = $region73
    $region72: #{tpu_custom_call.1} parent=1 // pred_region
      %172 = dma.done [#allocation12], 32
    $region73: #{tpu_custom_call.1} parent=1 // pred_fallthru
      _
    // Predicated region
    $region74: #{tpu_custom_call.1} parent=1 // pred_check
      _
    $region75: #{tpu_custom_call.1} parent=1 // pred_check_branch
      %174 = sbr.rel (0) target = $region77
    $region76: #{tpu_custom_call.1} parent=1 // pred_region
      %175 = dma.done [#allocation12], 32
    $region77: #{tpu_custom_call.1} parent=1 // pred_fallthru
      _
    // Predicated region
    $region78: #{tpu_custom_call.1} parent=1 // pred_check
      _
    $region79: #{tpu_custom_call.1} parent=1 // pred_check_branch
      %177 = sbr.rel (0) target = $region81
    $region80: #{tpu_custom_call.1} parent=1 // pred_region
      %178 = dma.done [#allocation15], 6144
    $region81: #{tpu_custom_call.1} parent=1 // pred_fallthru
      _
    // Predicated region
    $region82: #{tpu_custom_call.1} parent=1 // pred_check
      _
    $region83: #{tpu_custom_call.1} parent=1 // pred_check_branch
      %180 = sbr.rel (0) target = $region85
    $region84: #{tpu_custom_call.1} parent=1 // pred_region
      %181 = dma.done [#allocation15], 16
    $region85: #{tpu_custom_call.1} parent=1 // pred_fallthru
      _
    // Predicated region
    $region86: #{tpu_custom_call.1} parent=1 // pred_check
      _
    $region87: #{tpu_custom_call.1} parent=1 // pred_check_branch
      %183 = sbr.rel (0) target = $region89
    $region88: #{tpu_custom_call.1} parent=1 // pred_region
      %184 = dma.done [#allocation18], 16
    $region89: #{tpu_custom_call.1} parent=1 // pred_fallthru
      _
    // Predicated region
    $region90: #{tpu_custom_call.1} parent=1 // pred_check
      _
    $region91: #{tpu_custom_call.1} parent=1 // pred_check_branch
      %186 = sbr.rel (0) target = $region93
    $region92: #{tpu_custom_call.1} parent=1 // pred_region
      %187 = dma.done [#allocation18], 1024
    $region93: #{tpu_custom_call.1} parent=1 // pred_fallthru
      _
    // Predicated region
    $region94: #{tpu_custom_call.1} parent=1 // pred_check
      _
    $region95: #{tpu_custom_call.1} parent=1 // pred_check_branch
      %189 = sbr.rel (0) target = $region97
    $region96: #{tpu_custom_call.1} parent=1 // pred_region
      %190 = dma.done [#allocation21], 16
    $region97: #{tpu_custom_call.1} parent=1 // pred_fallthru
      _
    %v192 = vld [vmem:[#allocation2] sm:$0xff]
    %v193 = vld [vmem:[#allocation2 + $0x8] sm:$0xff]
    %v194 = vld [vmem:[#allocation2 + $0x10] sm:$0xff]
    %v195 = vld [vmem:[#allocation2 + $0x18] sm:$0xff]
    %v196 = vld [vmem:[#allocation2 + $0x20] sm:$0xff]
    %v197 = vld [vmem:[#allocation2 + $0x28] sm:$0xff]
    %v198 = vld [vmem:[#allocation2 + $0x30] sm:$0xff]
    %v199 = vld [vmem:[#allocation2 + $0x38] sm:$0xff]
    %v200 = vld [vmem:[#allocation2 + $0x40] sm:$0xff]
    %v201 = vld [vmem:[#allocation2 + $0x48] sm:$0xff]
    %v202 = vld [vmem:[#allocation2 + $0x50] sm:$0xff]
    %v203 = vld [vmem:[#allocation2 + $0x58] sm:$0xff]
    %vm216 = vcmask 1046528
    %v217 = vrot.slane %v192, 1
    %v218 = vrot.slane %v193, 1
    %v219 = vsel %vm216, %v217, %v218
    %v220 = vrot.slane %v194, 1
    %v221 = vsel %vm216, %v218, %v220
    %v222 = vrot.slane %v195, 1
    %v223 = vsel %vm216, %v220, %v222
    %v224 = vrot.slane %v196, 1
    %v225 = vsel %vm216, %v222, %v224
    %v226 = vrot.slane %v197, 1
    %v227 = vsel %vm216, %v224, %v226
    %v228 = vrot.slane %v198, 1
    %v229 = vrot.slane %v199, 1
    %v230 = vsel %vm216, %v228, %v229
    %v231 = vrot.slane %v200, 1
    %v232 = vsel %vm216, %v229, %v231
    %v233 = vrot.slane %v201, 1
    %v234 = vsel %vm216, %v231, %v233
    %v235 = vrot.slane %v202, 1
    %v236 = vsel %vm216, %v233, %v235
    %v237 = vrot.slane %v203, 1
    %v238 = vsel %vm216, %v235, %v237
    %239 = vrot.lane.b32.xlu0 %v219, 4
    %v240 = vpop.permute.xlu0 %239
    %241 = vrot.lane.b32.xlu0 %v221, 4
    %v242 = vpop.permute.xlu0 %241
    %243 = vrot.lane.b32.xlu0 %v223, 4
    %v244 = vpop.permute.xlu0 %243
    %245 = vrot.lane.b32.xlu0 %v225, 4
    %v246 = vpop.permute.xlu0 %245
    %247 = vrot.lane.b32.xlu0 %v227, 4
    %v248 = vpop.permute.xlu0 %247
    %249 = vrot.lane.b32.xlu0 %v230, 4
    %v250 = vpop.permute.xlu0 %249
    %251 = vrot.lane.b32.xlu0 %v232, 4
    %v252 = vpop.permute.xlu0 %251
    %253 = vrot.lane.b32.xlu0 %v234, 4
    %v254 = vpop.permute.xlu0 %253
    %255 = vrot.lane.b32.xlu0 %v236, 4
    %v256 = vpop.permute.xlu0 %255
    %257 = vrot.lane.b32.xlu0 %v238, 4
    %v258 = vpop.permute.xlu0 %257
    %vm269 = vcmask 1045504
    %v270 = vrot.slane %v192, 2
    %v271 = vrot.slane %v193, 2
    %v272 = vsel %vm269, %v270, %v271
    %v273 = vrot.slane %v194, 2
    %v274 = vsel %vm269, %v271, %v273
    %v275 = vrot.slane %v195, 2
    %v276 = vsel %vm269, %v273, %v275
    %v277 = vrot.slane %v196, 2
    %v278 = vsel %vm269, %v275, %v277
    %v279 = vrot.slane %v197, 2
    %v280 = vsel %vm269, %v277, %v279
    %v281 = vrot.slane %v198, 2
    %v282 = vrot.slane %v199, 2
    %v283 = vsel %vm269, %v281, %v282
    %v284 = vrot.slane %v200, 2
    %v285 = vsel %vm269, %v282, %v284
    %v286 = vrot.slane %v201, 2
    %v287 = vsel %vm269, %v284, %v286
    %v288 = vrot.slane %v202, 2
    %v289 = vsel %vm269, %v286, %v288
    %v290 = vrot.slane %v203, 2
    %v291 = vsel %vm269, %v288, %v290
    %292 = vrot.lane.b32.xlu0 %v272, 8
    %v293 = vpop.permute.xlu0 %292
    %294 = vrot.lane.b32.xlu0 %v274, 8
    %v295 = vpop.permute.xlu0 %294
    %296 = vrot.lane.b32.xlu0 %v276, 8
    %v297 = vpop.permute.xlu0 %296
    %298 = vrot.lane.b32.xlu0 %v278, 8
    %v299 = vpop.permute.xlu0 %298
    %300 = vrot.lane.b32.xlu0 %v280, 8
    %v301 = vpop.permute.xlu0 %300
    %302 = vrot.lane.b32.xlu0 %v283, 8
    %v303 = vpop.permute.xlu0 %302
    %304 = vrot.lane.b32.xlu0 %v285, 8
    %v305 = vpop.permute.xlu0 %304
    %306 = vrot.lane.b32.xlu0 %v287, 8
    %v307 = vpop.permute.xlu0 %306
    %308 = vrot.lane.b32.xlu0 %v289, 8
    %v309 = vpop.permute.xlu0 %308
    %310 = vrot.lane.b32.xlu0 %v291, 8
    %v311 = vpop.permute.xlu0 %310
    %vm322 = vcmask 1044480
    %v323 = vrot.slane %v192, 3
    %v324 = vrot.slane %v193, 3
    %v325 = vsel %vm322, %v323, %v324
    %v326 = vrot.slane %v194, 3
    %v327 = vsel %vm322, %v324, %v326
    %v328 = vrot.slane %v195, 3
    %v329 = vsel %vm322, %v326, %v328
    %v330 = vrot.slane %v196, 3
    %v331 = vsel %vm322, %v328, %v330
    %v332 = vrot.slane %v197, 3
    %v333 = vsel %vm322, %v330, %v332
    %v334 = vrot.slane %v198, 3
    %v335 = vrot.slane %v199, 3
    %v336 = vsel %vm322, %v334, %v335
    %v337 = vrot.slane %v200, 3
    %v338 = vsel %vm322, %v335, %v337
    %v339 = vrot.slane %v201, 3
    %v340 = vsel %vm322, %v337, %v339
    %v341 = vrot.slane %v202, 3
    %v342 = vsel %vm322, %v339, %v341
    %v343 = vrot.slane %v203, 3
    %v344 = vsel %vm322, %v341, %v343
    %345 = vrot.lane.b32.xlu0 %v325, 12
    %v346 = vpop.permute.xlu0 %345
    %347 = vrot.lane.b32.xlu0 %v327, 12
    %v348 = vpop.permute.xlu0 %347
    %349 = vrot.lane.b32.xlu0 %v329, 12
    %v350 = vpop.permute.xlu0 %349
    %351 = vrot.lane.b32.xlu0 %v331, 12
    %v352 = vpop.permute.xlu0 %351
    %353 = vrot.lane.b32.xlu0 %v333, 12
    %v354 = vpop.permute.xlu0 %353
    %355 = vrot.lane.b32.xlu0 %v336, 12
    %v356 = vpop.permute.xlu0 %355
    %357 = vrot.lane.b32.xlu0 %v338, 12
    %v358 = vpop.permute.xlu0 %357
    %359 = vrot.lane.b32.xlu0 %v340, 12
    %v360 = vpop.permute.xlu0 %359
    %361 = vrot.lane.b32.xlu0 %v342, 12
    %v362 = vpop.permute.xlu0 %361
    %363 = vrot.lane.b32.xlu0 %v344, 12
    %v364 = vpop.permute.xlu0 %363
    %vm375 = vcmask 1043456
    %v376 = vrot.slane %v192, 4
    %v377 = vrot.slane %v193, 4
    %v378 = vsel %vm375, %v376, %v377
    %v379 = vrot.slane %v194, 4
    %v380 = vsel %vm375, %v377, %v379
    %v381 = vrot.slane %v195, 4
    %v382 = vsel %vm375, %v379, %v381
    %v383 = vrot.slane %v196, 4
    %v384 = vsel %vm375, %v381, %v383
    %v385 = vrot.slane %v197, 4
    %v386 = vsel %vm375, %v383, %v385
    %v387 = vrot.slane %v198, 4
    %v388 = vrot.slane %v199, 4
    %v389 = vsel %vm375, %v387, %v388
    %v390 = vrot.slane %v200, 4
    %v391 = vsel %vm375, %v388, %v390
    %v392 = vrot.slane %v201, 4
    %v393 = vsel %vm375, %v390, %v392
    %v394 = vrot.slane %v202, 4
    %v395 = vsel %vm375, %v392, %v394
    %v396 = vrot.slane %v203, 4
    %v397 = vsel %vm375, %v394, %v396
    %398 = vrot.lane.b32.xlu0 %v378, 16
    %v399 = vpop.permute.xlu0 %398
    %400 = vrot.lane.b32.xlu0 %v380, 16
    %v401 = vpop.permute.xlu0 %400
    %402 = vrot.lane.b32.xlu0 %v382, 16
    %v403 = vpop.permute.xlu0 %402
    %404 = vrot.lane.b32.xlu0 %v384, 16
    %v405 = vpop.permute.xlu0 %404
    %406 = vrot.lane.b32.xlu0 %v386, 16
    %v407 = vpop.permute.xlu0 %406
    %408 = vrot.lane.b32.xlu0 %v389, 16
    %v409 = vpop.permute.xlu0 %408
    %410 = vrot.lane.b32.xlu0 %v391, 16
    %v411 = vpop.permute.xlu0 %410
    %412 = vrot.lane.b32.xlu0 %v393, 16
    %v413 = vpop.permute.xlu0 %412
    %414 = vrot.lane.b32.xlu0 %v395, 16
    %v415 = vpop.permute.xlu0 %414
    %416 = vrot.lane.b32.xlu0 %v397, 16
    %v417 = vpop.permute.xlu0 %416
    %vm428 = vcmask 1042432
    %v429 = vrot.slane %v192, 5
    %v430 = vrot.slane %v193, 5
    %v431 = vsel %vm428, %v429, %v430
    %v432 = vrot.slane %v194, 5
    %v433 = vsel %vm428, %v430, %v432
    %v434 = vrot.slane %v195, 5
    %v435 = vsel %vm428, %v432, %v434
    %v436 = vrot.slane %v196, 5
    %v437 = vsel %vm428, %v434, %v436
    %v438 = vrot.slane %v197, 5
    %v439 = vsel %vm428, %v436, %v438
    %v440 = vrot.slane %v198, 5
    %v441 = vrot.slane %v199, 5
    %v442 = vsel %vm428, %v440, %v441
    %v443 = vrot.slane %v200, 5
    %v444 = vsel %vm428, %v441, %v443
    %v445 = vrot.slane %v201, 5
    %v446 = vsel %vm428, %v443, %v445
    %v447 = vrot.slane %v202, 5
    %v448 = vsel %vm428, %v445, %v447
    %v449 = vrot.slane %v203, 5
    %v450 = vsel %vm428, %v447, %v449
    %451 = vrot.lane.b32.xlu0 %v431, 20
    %v452 = vpop.permute.xlu0 %451
    %453 = vrot.lane.b32.xlu0 %v433, 20
    %v454 = vpop.permute.xlu0 %453
    %455 = vrot.lane.b32.xlu0 %v435, 20
    %v456 = vpop.permute.xlu0 %455
    %457 = vrot.lane.b32.xlu0 %v437, 20
    %v458 = vpop.permute.xlu0 %457
    %459 = vrot.lane.b32.xlu0 %v439, 20
    %v460 = vpop.permute.xlu0 %459
    %461 = vrot.lane.b32.xlu0 %v442, 20
    %v462 = vpop.permute.xlu0 %461
    %463 = vrot.lane.b32.xlu0 %v444, 20
    %v464 = vpop.permute.xlu0 %463
    %465 = vrot.lane.b32.xlu0 %v446, 20
    %v466 = vpop.permute.xlu0 %465
    %467 = vrot.lane.b32.xlu0 %v448, 20
    %v468 = vpop.permute.xlu0 %467
    %469 = vrot.lane.b32.xlu0 %v450, 20
    %v470 = vpop.permute.xlu0 %469
    %vm481 = vcmask 1041408
    %v482 = vrot.slane %v192, 6
    %v483 = vrot.slane %v193, 6
    %v484 = vsel %vm481, %v482, %v483
    %v485 = vrot.slane %v194, 6
    %v486 = vsel %vm481, %v483, %v485
    %v487 = vrot.slane %v195, 6
    %v488 = vsel %vm481, %v485, %v487
    %v489 = vrot.slane %v196, 6
    %v490 = vsel %vm481, %v487, %v489
    %v491 = vrot.slane %v197, 6
    %v492 = vsel %vm481, %v489, %v491
    %v493 = vrot.slane %v198, 6
    %v494 = vrot.slane %v199, 6
    %v495 = vsel %vm481, %v493, %v494
    %v496 = vrot.slane %v200, 6
    %v497 = vsel %vm481, %v494, %v496
    %v498 = vrot.slane %v201, 6
    %v499 = vsel %vm481, %v496, %v498
    %v500 = vrot.slane %v202, 6
    %v501 = vsel %vm481, %v498, %v500
    %v502 = vrot.slane %v203, 6
    %v503 = vsel %vm481, %v500, %v502
    %504 = vrot.lane.b32.xlu0 %v484, 24
    %v505 = vpop.permute.xlu0 %504
    %506 = vrot.lane.b32.xlu0 %v486, 24
    %v507 = vpop.permute.xlu0 %506
    %508 = vrot.lane.b32.xlu0 %v488, 24
    %v509 = vpop.permute.xlu0 %508
    %510 = vrot.lane.b32.xlu0 %v490, 24
    %v511 = vpop.permute.xlu0 %510
    %512 = vrot.lane.b32.xlu0 %v492, 24
    %v513 = vpop.permute.xlu0 %512
    %514 = vrot.lane.b32.xlu0 %v495, 24
    %v515 = vpop.permute.xlu0 %514
    %516 = vrot.lane.b32.xlu0 %v497, 24
    %v517 = vpop.permute.xlu0 %516
    %518 = vrot.lane.b32.xlu0 %v499, 24
    %v519 = vpop.permute.xlu0 %518
    %520 = vrot.lane.b32.xlu0 %v501, 24
    %v521 = vpop.permute.xlu0 %520
    %522 = vrot.lane.b32.xlu0 %v503, 24
    %v523 = vpop.permute.xlu0 %522
    %vm534 = vcmask 1040384
    %v535 = vrot.slane %v192, 7
    %v536 = vrot.slane %v193, 7
    %v537 = vsel %vm534, %v535, %v536
    %v538 = vrot.slane %v194, 7
    %v539 = vsel %vm534, %v536, %v538
    %v540 = vrot.slane %v195, 7
    %v541 = vsel %vm534, %v538, %v540
    %v542 = vrot.slane %v196, 7
    %v543 = vsel %vm534, %v540, %v542
    %v544 = vrot.slane %v197, 7
    %v545 = vsel %vm534, %v542, %v544
    %v546 = vrot.slane %v198, 7
    %v547 = vrot.slane %v199, 7
    %v548 = vsel %vm534, %v546, %v547
    %v549 = vrot.slane %v200, 7
    %v550 = vsel %vm534, %v547, %v549
    %v551 = vrot.slane %v201, 7
    %v552 = vsel %vm534, %v549, %v551
    %v553 = vrot.slane %v202, 7
    %v554 = vsel %vm534, %v551, %v553
    %v555 = vrot.slane %v203, 7
    %v556 = vsel %vm534, %v553, %v555
    %557 = vrot.lane.b32.xlu0 %v537, 28
    %v558 = vpop.permute.xlu0 %557
    %559 = vrot.lane.b32.xlu0 %v539, 28
    %v560 = vpop.permute.xlu0 %559
    %561 = vrot.lane.b32.xlu0 %v541, 28
    %v562 = vpop.permute.xlu0 %561
    %563 = vrot.lane.b32.xlu0 %v543, 28
    %v564 = vpop.permute.xlu0 %563
    %565 = vrot.lane.b32.xlu0 %v545, 28
    %v566 = vpop.permute.xlu0 %565
    %567 = vrot.lane.b32.xlu0 %v548, 28
    %v568 = vpop.permute.xlu0 %567
    %569 = vrot.lane.b32.xlu0 %v550, 28
    %v570 = vpop.permute.xlu0 %569
    %571 = vrot.lane.b32.xlu0 %v552, 28
    %v572 = vpop.permute.xlu0 %571
    %573 = vrot.lane.b32.xlu0 %v554, 28
    %v574 = vpop.permute.xlu0 %573
    %575 = vrot.lane.b32.xlu0 %v556, 28
    %v576 = vpop.permute.xlu0 %575
    %vm587 = vcmask 31744
    %v588 = vsel %vm587, %v192, %v240
    %v589 = vsel %vm587, %v193, %v242
    %v590 = vsel %vm587, %v194, %v244
    %v591 = vsel %vm587, %v195, %v246
    %v592 = vsel %vm587, %v196, %v248
    %v593 = vsel %vm587, %v198, %v250
    %v594 = vsel %vm587, %v199, %v252
    %v595 = vsel %vm587, %v200, %v254
    %v596 = vsel %vm587, %v201, %v256
    %v597 = vsel %vm587, %v202, %v258
    %vm598 = vcmask 64512
    %v599 = vsel %vm598, %v588, %v293
    %v600 = vsel %vm598, %v589, %v295
    %v601 = vsel %vm598, %v590, %v297
    %v602 = vsel %vm598, %v591, %v299
    %v603 = vsel %vm598, %v592, %v301
    %v604 = vsel %vm598, %v593, %v303
    %v605 = vsel %vm598, %v594, %v305
    %v606 = vsel %vm598, %v595, %v307
    %v607 = vsel %vm598, %v596, %v309
    %v608 = vsel %vm598, %v597, %v311
    %vm609 = vcmask 97280
    %v610 = vsel %vm609, %v599, %v346
    %v611 = vsel %vm609, %v600, %v348
    %v612 = vsel %vm609, %v601, %v350
    %v613 = vsel %vm609, %v602, %v352
    %v614 = vsel %vm609, %v603, %v354
    %v615 = vsel %vm609, %v604, %v356
    %v616 = vsel %vm609, %v605, %v358
    %v617 = vsel %vm609, %v606, %v360
    %v618 = vsel %vm609, %v607, %v362
    %v619 = vsel %vm609, %v608, %v364
    %vm620 = vcmask 130048
    %v621 = vsel %vm620, %v610, %v399
    %v622 = vsel %vm620, %v611, %v401
    %v623 = vsel %vm620, %v612, %v403
    %v624 = vsel %vm620, %v613, %v405
    %v625 = vsel %vm620, %v614, %v407
    %v626 = vsel %vm620, %v615, %v409
    %v627 = vsel %vm620, %v616, %v411
    %v628 = vsel %vm620, %v617, %v413
    %v629 = vsel %vm620, %v618, %v415
    %v630 = vsel %vm620, %v619, %v417
    %vm631 = vcmask 162816
    %v632 = vsel %vm631, %v621, %v452
    %v633 = vsel %vm631, %v622, %v454
    %v634 = vsel %vm631, %v623, %v456
    %v635 = vsel %vm631, %v624, %v458
    %v636 = vsel %vm631, %v625, %v460
    %v637 = vsel %vm631, %v626, %v462
    %v638 = vsel %vm631, %v627, %v464
    %v639 = vsel %vm631, %v628, %v466
    %v640 = vsel %vm631, %v629, %v468
    %v641 = vsel %vm631, %v630, %v470
    %vm642 = vcmask 195584
    %v643 = vsel %vm642, %v632, %v505
    %v644 = vsel %vm642, %v633, %v507
    %v645 = vsel %vm642, %v634, %v509
    %v646 = vsel %vm642, %v635, %v511
    %v647 = vsel %vm642, %v636, %v513
    %v648 = vsel %vm642, %v637, %v515
    %v649 = vsel %vm642, %v638, %v517
    %v650 = vsel %vm642, %v639, %v519
    %v651 = vsel %vm642, %v640, %v521
    %v652 = vsel %vm642, %v641, %v523
    %vm653 = vcmask 228352
    %v654 = vsel %vm653, %v643, %v558
    %v655 = vsel %vm653, %v644, %v560
    %v656 = vsel %vm653, %v645, %v562
    %v657 = vsel %vm653, %v646, %v564
    %v658 = vsel %vm653, %v647, %v566
    %v659 = vsel %vm653, %v648, %v568
    %v660 = vsel %vm653, %v649, %v570
    %v661 = vsel %vm653, %v650, %v572
    %v662 = vsel %vm653, %v651, %v574
    %v663 = vsel %vm653, %v652, %v576
    %v664 = vpack.c.bf16 %v655, %v654
    %v665 = vpack.c.bf16 %v657, %v656
    %v666 = vpack.c.bf16 %v658, %v658
    %v667 = vpack.c.bf16 %v660, %v659
    %v668 = vpack.c.bf16 %v662, %v661
    %v669 = vpack.c.bf16 %v663, %v663
    %v670 = vld [vmem:[#allocation5] sm:$0xf]
    %v671 = vld [vmem:[#allocation5 + $0x4] sm:$0xf]
    %v672 = vld [vmem:[#allocation5 + $0x8] sm:$0xf]
    %v673 = vld [vmem:[#allocation5 + $0xc] sm:$0xf]
    %v680 = vunpack.c.l.b16 %v664
    %v681 = vunpack.c.h.b16 %v664
    %v682 = vunpack.c.l.b16 %v665
    %v683 = vunpack.c.h.b16 %v665
    %v684 = vunpack.c.l.b16 %v666
    %v685 = vunpack.c.l.b16 %v667
    %v686 = vunpack.c.h.b16 %v667
    %v687 = vunpack.c.l.b16 %v668
    %v688 = vunpack.c.h.b16 %v668
    %v689 = vunpack.c.l.b16 %v669
    %v690 = vpack.c.b16 %v681, %v680
    %v691 = vpack.c.b16 %v683, %v682
    %v692 = vpack.c.b16 %v685, %v684
    %v693 = vpack.c.b16 %v687, %v686
    %v694 = vpack.c.b16 %v689, %v688
    %v699 = vunpack.c.l.b16 %v670
    %v700 = vunpack.c.l.b16 %v671
    %v701 = vunpack.c.l.b16 %v672
    %v702 = vunpack.c.l.b16 %v673
    %v703 = vpack.c.b16 %v700, %v699
    %v704 = vpack.c.b16 %v702, %v701
    %vm707 = vcmask 261120
    %v709 = vsel %vm707, %v690, 0
    %v712 = vsel %vm707, %v691, 0
    %v715 = vsel %vm707, %v692, 0
    %v718 = vsel %vm707, %v693, 0
    %v721 = vsel %vm707, %v694, 0
    %723 = vmatprep.subr.bf16.mxu0 0
    %724 = vmatpush1.bf16.msra.mxu0 %v703
    %725 = vmatprep.subr.bf16.mxu0 0
    %726 = vmatpush1.bf16.msra.mxu0 %v704
    %727 = vmatprep.subr.bf16.mxu0 0
    %728 = vmatpush1.bf16.msra.mxu0 0
    %729 = vmatprep.subr.bf16.mxu0 0
    %730 = vmatpush1.bf16.msra.mxu0 0
    %731 = vmatprep.subr.bf16.mxu0 0
    %732 = vmatpush1.bf16.msra.mxu0 0
    %733 = vmatprep.subr.bf16.mxu0 0
    %734 = vmatpush1.bf16.msra.mxu0 0
    %735 = vmatprep.subr.bf16.mxu0 0
    %736 = vmatpush1.bf16.msra.mxu0 0
    %737 = vmatprep.subr.bf16.mxu0 0
    %738 = vmatpush1.bf16.msra.mxu0 0
    %739 = vmatprep.subr.bf16.mxu0 0
    %740 = vmatpush1.bf16.msra.mxu0 0
    %741 = vmatprep.subr.bf16.mxu0 0
    %742 = vmatpush1.bf16.msra.mxu0 0
    %743 = vmatprep.subr.bf16.mxu0 0
    %744 = vmatpush1.bf16.msra.mxu0 0
    %745 = vmatprep.subr.bf16.mxu0 0
    %746 = vmatpush1.bf16.msra.mxu0 0
    %747 = vmatprep.subr.bf16.mxu0 0
    %748 = vmatpush1.bf16.msra.mxu0 0
    %749 = vmatprep.subr.bf16.mxu0 0
    %750 = vmatpush1.bf16.msra.mxu0 0
    %751 = vmatprep.subr.bf16.mxu0 0
    %752 = vmatpush1.bf16.msra.mxu0 0
    %753 = vmatprep.subr.bf16.mxu0 0
    %754 = vmatpush1.bf16.msra.mxu0 0
    %755 = vmatprep.mubr.bf16.mxu0 0
    %756 = vmatmul.mubr.bf16.gmra.mrb[0].mxu0 %v709
    %v757 = vpop.f32.mrb[0].mxu0
    %v758 = vadd.f32 0.0, %v757
    %v759 = vpop.f32.mrb[0].mxu0
    %v760 = vpop.f32.mrb[0].mxu0
    %v761 = vadd.f32 0.0, %v760
    %v762 = vpop.f32.mrb[0].mxu0
    %763 = vmatprep.mubr.bf16.mxu0 0
    %764 = vmatmul.mubr.bf16.gmra.mrb[0].mxu0 %v712
    %v765 = vpop.f32.mrb[0].mxu0
    %v766 = vadd.f32 0.0, %v765
    %v767 = vpop.f32.mrb[0].mxu0
    %v768 = vpop.f32.mrb[0].mxu0
    %v769 = vadd.f32 0.0, %v768
    %v770 = vpop.f32.mrb[0].mxu0
    %771 = vmatprep.mubr.bf16.mxu0 0
    %772 = vmatmul.mubr.bf16.gmra.mrb[0].mxu0 %v715
    %v773 = vpop.f32.mrb[0].mxu0
    %v774 = vadd.f32 0.0, %v773
    %v775 = vpop.f32.mrb[0].mxu0
    %v776 = vpop.f32.mrb[0].mxu0
    %v777 = vadd.f32 0.0, %v776
    %v778 = vpop.f32.mrb[0].mxu0
    %779 = vmatprep.mubr.bf16.mxu0 0
    %780 = vmatmul.mubr.bf16.gmra.mrb[0].mxu0 %v718
    %v781 = vpop.f32.mrb[0].mxu0
    %v782 = vadd.f32 0.0, %v781
    %v783 = vpop.f32.mrb[0].mxu0
    %v784 = vpop.f32.mrb[0].mxu0
    %v785 = vadd.f32 0.0, %v784
    %v786 = vpop.f32.mrb[0].mxu0
    %787 = vmatprep.mubr.bf16.mxu0 0
    %788 = vmatmul.mubr.bf16.gmra.mrb[0].mxu0 %v721
    %v789 = vpop.f32.mrb[0].mxu0
    %v790 = vadd.f32 0.0, %v789
    %v791 = vpop.f32.mrb[0].mxu0
    %v792 = vpop.f32.mrb[0].mxu0
    %v793 = vadd.f32 0.0, %v792
    %v794 = vpop.f32.mrb[0].mxu0
    %795 = vdwg.mxu0
    %v796 = vlaneseq
    %v797 = vshrl.u32 %v796, 7
    %v798 = vadd.s32 %v797, 8
    %v799 = vadd.s32 %v797, 16
    %v800 = vadd.s32 %v797, 24
    %v801 = vadd.s32 %v797, 32
    %vm802 = vcmp.lt.s32.totalorder %v797, 25
    %vm803 = vcmp.lt.s32.totalorder %v798, 25
    %vm804 = vcmp.lt.s32.totalorder %v799, 25
    %vm805 = vcmp.lt.s32.totalorder %v800, 25
    %vm806 = vcmp.lt.s32.totalorder %v801, 25
    %v807 = vsel %vm802, 1, 0
    %v808 = vsel %vm803, 1, 0
    %v809 = vsel %vm804, 1, 0
    %v810 = vsel %vm805, 1, 0
    %v811 = vsel %vm806, 1, 0
    %vm812 = vcmp.eq.s32.totalorder %v807, 1
    %vm813 = vcmp.eq.s32.totalorder %v808, 1
    %vm814 = vcmp.eq.s32.totalorder %v809, 1
    %vm815 = vcmp.eq.s32.totalorder %v810, 1
    %vm816 = vcmp.eq.s32.totalorder %v811, 1
    %v817 = vsel %vm812, %v758, 0.0
    %v818 = vsel %vm813, %v761, 0.0
    %v819 = vsel %vm814, %v766, 0.0
    %v820 = vsel %vm815, %v769, 0.0
    %v821 = vsel %vm816, %v774, 0.0
    %v822 = vsel %vm812, %v777, 0.0
    %v823 = vsel %vm813, %v782, 0.0
    %v824 = vsel %vm814, %v785, 0.0
    %v825 = vsel %vm815, %v790, 0.0
    %v826 = vsel %vm816, %v793, 0.0
    %v827 = vadd.f32 %v817, %v818
    %v828 = vadd.f32 %v827, %v819
    %v829 = vadd.f32 %v828, %v820
    %v830 = vadd.f32 %v829, %v821
    %v831 = vadd.f32 %v830, %v822
    %v832 = vadd.f32 %v831, %v823
    %v833 = vadd.f32 %v832, %v824
    %v834 = vadd.f32 %v833, %v825
    %v835 = vadd.f32 %v834, %v826
    %v836 = vrot.slane %v835, 4
    %v837 = vadd.f32 %v835, %v836
    %v838 = vrot.slane %v837, 2
    %v839 = vadd.f32 %v837, %v838
    %v840 = vrot.slane %v839, 1
    %v841 = vadd.f32 %v839, %v840
    %v842 = vmul.f32 %v841, 0.02
    %v843 = vmul.f32 %v817, %v817
    %v844 = vmul.f32 %v818, %v818
    %v845 = vmul.f32 %v819, %v819
    %v846 = vmul.f32 %v820, %v820
    %v847 = vmul.f32 %v821, %v821
    %v848 = vmul.f32 %v822, %v822
    %v849 = vmul.f32 %v823, %v823
    %v850 = vmul.f32 %v824, %v824
    %v851 = vmul.f32 %v825, %v825
    %v852 = vmul.f32 %v826, %v826
    %v853 = vadd.f32 %v843, %v844
    %v854 = vadd.f32 %v853, %v845
    %v855 = vadd.f32 %v854, %v846
    %v856 = vadd.f32 %v855, %v847
    %v857 = vadd.f32 %v856, %v848
    %v858 = vadd.f32 %v857, %v849
    %v859 = vadd.f32 %v858, %v850
    %v860 = vadd.f32 %v859, %v851
    %v861 = vadd.f32 %v860, %v852
    %v862 = vrot.slane %v861, 4
    %v863 = vadd.f32 %v861, %v862
    %v864 = vrot.slane %v863, 2
    %v865 = vadd.f32 %v863, %v864
    %v866 = vrot.slane %v865, 1
    %v867 = vadd.f32 %v865, %v866
    %v868 = vmul.f32 %v867, 0.02
    %v869 = vmul.f32 %v842, %v842
    %v870 = vsub.f32 %v868, %v869
    %v871 = vmax.f32 %v870, 0.0
    %v872 = vld [vmem:[#allocation7] sm:$0x1]
    %v873 = vadd.f32 %v871, 1e-05
    %v874 = vrsqrt.pop %v873
    %v875 = vmul.f32 %v872, %v874
    %v876 = vld [vmem:[#allocation8] sm:$0x1]
    %v877 = vmul.f32 %v842, %v875
    %v878 = vsub.f32 %v876, %v877
    %v880 = vlaneseq
    %v881 = vshrl.u32 %v880, 7
    %v882 = vsub.s32 0, %v881
    %v883 = vrot.slane %v875, %v882
    %v885 = vmul.f32 %v817, %v883
    %v886 = vmul.f32 %v818, %v883
    %v887 = vmul.f32 %v819, %v883
    %v888 = vmul.f32 %v820, %v883
    %v889 = vmul.f32 %v821, %v883
    %v890 = vmul.f32 %v822, %v883
    %v891 = vmul.f32 %v823, %v883
    %v892 = vmul.f32 %v824, %v883
    %v893 = vmul.f32 %v825, %v883
    %v894 = vmul.f32 %v826, %v883
    %v896 = vlaneseq
    %v897 = vshrl.u32 %v896, 7
    %v898 = vsub.s32 0, %v897
    %v899 = vrot.slane %v878, %v898
    %v901 = vadd.f32 %v885, %v899
    %v902 = vadd.f32 %v886, %v899
    %v903 = vadd.f32 %v887, %v899
    %v904 = vadd.f32 %v888, %v899
    %v905 = vadd.f32 %v889, %v899
    %v906 = vadd.f32 %v890, %v899
    %v907 = vadd.f32 %v891, %v899
    %v908 = vadd.f32 %v892, %v899
    %v909 = vadd.f32 %v893, %v899
    %v910 = vadd.f32 %v894, %v899
    %v911 = vmax.f32 %v901, 0.0
    %v912 = vmax.f32 %v902, 0.0
    %v913 = vmax.f32 %v903, 0.0
    %v914 = vmax.f32 %v904, 0.0
    %v915 = vmax.f32 %v905, 0.0
    %v916 = vmax.f32 %v906, 0.0
    %v917 = vmax.f32 %v907, 0.0
    %v918 = vmax.f32 %v908, 0.0
    %v919 = vmax.f32 %v909, 0.0
    %v920 = vmax.f32 %v910, 0.0
    %v931 = vrot.slane %v911, 1
    %v932 = vrot.slane %v912, 1
    %v933 = vsel %vm216, %v931, %v932
    %v934 = vrot.slane %v913, 1
    %v935 = vsel %vm216, %v932, %v934
    %v936 = vrot.slane %v914, 1
    %v937 = vsel %vm216, %v934, %v936
    %v938 = vrot.slane %v915, 1
    %v939 = vsel %vm216, %v936, %v938
    %v940 = vrot.slane %v916, 1
    %v941 = vrot.slane %v917, 1
    %v942 = vsel %vm216, %v940, %v941
    %v943 = vrot.slane %v918, 1
    %v944 = vsel %vm216, %v941, %v943
    %v945 = vrot.slane %v919, 1
    %v946 = vsel %vm216, %v943, %v945
    %v947 = vrot.slane %v920, 1
    %v948 = vsel %vm216, %v945, %v947
    %v957 = vrot.slane %v911, 2
    %v958 = vrot.slane %v912, 2
    %v959 = vsel %vm269, %v957, %v958
    %v960 = vrot.slane %v913, 2
    %v961 = vsel %vm269, %v958, %v960
    %v962 = vrot.slane %v914, 2
    %v963 = vsel %vm269, %v960, %v962
    %v964 = vrot.slane %v915, 2
    %v965 = vsel %vm269, %v962, %v964
    %v966 = vrot.slane %v916, 2
    %v967 = vrot.slane %v917, 2
    %v968 = vsel %vm269, %v966, %v967
    %v969 = vrot.slane %v918, 2
    %v970 = vsel %vm269, %v967, %v969
    %v971 = vrot.slane %v919, 2
    %v972 = vsel %vm269, %v969, %v971
    %v973 = vrot.slane %v920, 2
    %v974 = vsel %vm269, %v971, %v973
    %v983 = vrot.slane %v911, 3
    %v984 = vrot.slane %v912, 3
    %v985 = vsel %vm322, %v983, %v984
    %v986 = vrot.slane %v913, 3
    %v987 = vsel %vm322, %v984, %v986
    %v988 = vrot.slane %v914, 3
    %v989 = vsel %vm322, %v986, %v988
    %v990 = vrot.slane %v915, 3
    %v991 = vsel %vm322, %v988, %v990
    %v992 = vrot.slane %v916, 3
    %v993 = vrot.slane %v917, 3
    %v994 = vsel %vm322, %v992, %v993
    %v995 = vrot.slane %v918, 3
    %v996 = vsel %vm322, %v993, %v995
    %v997 = vrot.slane %v919, 3
    %v998 = vsel %vm322, %v995, %v997
    %v999 = vrot.slane %v920, 3
    %v1000 = vsel %vm322, %v997, %v999
    %v1009 = vrot.slane %v911, 4
    %v1010 = vrot.slane %v912, 4
    %v1011 = vsel %vm375, %v1009, %v1010
    %v1012 = vrot.slane %v913, 4
    %v1013 = vsel %vm375, %v1010, %v1012
    %v1014 = vrot.slane %v914, 4
    %v1015 = vsel %vm375, %v1012, %v1014
    %v1016 = vrot.slane %v915, 4
    %v1017 = vsel %vm375, %v1014, %v1016
    %v1018 = vrot.slane %v916, 4
    %v1019 = vrot.slane %v917, 4
    %v1020 = vsel %vm375, %v1018, %v1019
    %v1021 = vrot.slane %v918, 4
    %v1022 = vsel %vm375, %v1019, %v1021
    %v1023 = vrot.slane %v919, 4
    %v1024 = vsel %vm375, %v1021, %v1023
    %v1025 = vrot.slane %v920, 4
    %v1026 = vsel %vm375, %v1023, %v1025
    %v1035 = vpack.c.bf16 %v912, %v911
    %v1036 = vpack.c.bf16 %v935, %v933
    %v1037 = vpack.c.bf16 %v961, %v959
    %v1038 = vpack.c.bf16 %v987, %v985
    %v1039 = vpack.c.bf16 %v1013, %v1011
    %v1040 = vpack.c.bf16 %v914, %v913
    %v1041 = vpack.c.bf16 %v939, %v937
    %v1042 = vpack.c.bf16 %v965, %v963
    %v1043 = vpack.c.bf16 %v991, %v989
    %v1044 = vpack.c.bf16 %v1017, %v1015
    %v1045 = vpack.c.bf16 %v917, %v916
    %v1046 = vpack.c.bf16 %v944, %v942
    %v1047 = vpack.c.bf16 %v970, %v968
    %v1048 = vpack.c.bf16 %v996, %v994
    %v1049 = vpack.c.bf16 %v1022, %v1020
    %v1050 = vpack.c.bf16 %v919, %v918
    %v1051 = vpack.c.bf16 %v948, %v946
    %v1052 = vpack.c.bf16 %v974, %v972
    %v1053 = vpack.c.bf16 %v1000, %v998
    %v1054 = vpack.c.bf16 %v1026, %v1024
    %v1055 = vld [vmem:[#allocation10] sm:$0xff]
    %v1056 = vld [vmem:[#allocation10 + $0x8] sm:$0xff]
    %v1057 = vld [vmem:[#allocation10 + $0x10] sm:$0xff]
    %v1058 = vld [vmem:[#allocation10 + $0x18] sm:$0xff]
    %v1059 = vld [vmem:[#allocation10 + $0x20] sm:$0xff]
    %v1060 = vld [vmem:[#allocation10 + $0x28] sm:$0xff]
    %v1061 = vld [vmem:[#allocation10 + $0x30] sm:$0xff]
    %v1062 = vld [vmem:[#allocation10 + $0x38] sm:$0xff]
    %v1063 = vld [vmem:[#allocation10 + $0x40] sm:$0xff]
    %v1064 = vld [vmem:[#allocation10 + $0x48] sm:$0xff]
    %v1065 = vld [vmem:[#allocation10 + $0x50] sm:$0xff]
    %v1066 = vld [vmem:[#allocation10 + $0x58] sm:$0xff]
    %v1067 = vld [vmem:[#allocation10 + $0x60] sm:$0xff]
    %v1068 = vld [vmem:[#allocation10 + $0x68] sm:$0xff]
    %v1069 = vld [vmem:[#allocation10 + $0x70] sm:$0xff]
    %v1070 = vld [vmem:[#allocation10 + $0x78] sm:$0xff]
    %v1071 = vld [vmem:[#allocation10 + $0x80] sm:$0xff]
    %v1072 = vld [vmem:[#allocation10 + $0x88] sm:$0xff]
    %v1073 = vld [vmem:[#allocation10 + $0x90] sm:$0xff]
    %v1074 = vld [vmem:[#allocation10 + $0x98] sm:$0xff]
    %v1075 = vld [vmem:[#allocation10 + $0xa0] sm:$0xff]
    %v1076 = vld [vmem:[#allocation10 + $0xa8] sm:$0xff]
    %v1077 = vld [vmem:[#allocation10 + $0xb0] sm:$0xff]
    %v1078 = vld [vmem:[#allocation10 + $0xb8] sm:$0xff]
    %v1079 = vld [vmem:[#allocation10 + $0xc0] sm:$0xff]
    %v1080 = vld [vmem:[#allocation10 + $0xc8] sm:$0xff]
    %v1081 = vld [vmem:[#allocation10 + $0xd0] sm:$0xff]
    %v1082 = vld [vmem:[#allocation10 + $0xd8] sm:$0xff]
    %v1083 = vld [vmem:[#allocation10 + $0xe0] sm:$0xff]
    %v1084 = vld [vmem:[#allocation10 + $0xe8] sm:$0xff]
    %v1085 = vld [vmem:[#allocation10 + $0xf0] sm:$0xff]
    %v1086 = vld [vmem:[#allocation10 + $0xf8] sm:$0xff]
    %v1087 = vld [vmem:[#allocation10 + $0x100] sm:$0xff]
    %v1088 = vld [vmem:[#allocation10 + $0x108] sm:$0xff]
    %v1089 = vld [vmem:[#allocation10 + $0x110] sm:$0xff]
    %v1090 = vld [vmem:[#allocation10 + $0x118] sm:$0xff]
    %v1091 = vld [vmem:[#allocation10 + $0x120] sm:$0xff]
    %v1092 = vld [vmem:[#allocation10 + $0x128] sm:$0xff]
    %v1093 = vld [vmem:[#allocation10 + $0x130] sm:$0xff]
    %v1094 = vld [vmem:[#allocation10 + $0x138] sm:$0xff]
    %v1095 = vld [vmem:[#allocation10 + $0x140] sm:$0xff]
    %v1096 = vld [vmem:[#allocation10 + $0x148] sm:$0xff]
    %v1097 = vld [vmem:[#allocation10 + $0x150] sm:$0xff]
    %v1098 = vld [vmem:[#allocation10 + $0x158] sm:$0xff]
    %v1099 = vld [vmem:[#allocation10 + $0x160] sm:$0xff]
    %v1100 = vld [vmem:[#allocation10 + $0x168] sm:$0xff]
    %v1101 = vld [vmem:[#allocation10 + $0x170] sm:$0xff]
    %v1102 = vld [vmem:[#allocation10 + $0x178] sm:$0xff]
    %v1103 = vld [vmem:[#allocation10 + $0x180] sm:$0xff]
    %v1104 = vld [vmem:[#allocation10 + $0x188] sm:$0xff]
    %v1105 = vld [vmem:[#allocation10 + $0x190] sm:$0xff]
    %v1106 = vld [vmem:[#allocation10 + $0x198] sm:$0xff]
    %v1107 = vld [vmem:[#allocation10 + $0x1a0] sm:$0xff]
    %v1108 = vld [vmem:[#allocation10 + $0x1a8] sm:$0xff]
    %v1109 = vld [vmem:[#allocation10 + $0x1b0] sm:$0xff]
    %v1110 = vld [vmem:[#allocation10 + $0x1b8] sm:$0xff]
    %v1111 = vld [vmem:[#allocation10 + $0x1c0] sm:$0xff]
    %v1112 = vld [vmem:[#allocation10 + $0x1c8] sm:$0xff]
    %v1113 = vld [vmem:[#allocation10 + $0x1d0] sm:$0xff]
    %v1114 = vld [vmem:[#allocation10 + $0x1d8] sm:$0xff]
    %v1115 = vld [vmem:[#allocation10 + $0x1e0] sm:$0xff]
    %v1116 = vld [vmem:[#allocation10 + $0x1e8] sm:$0xff]
    %v1117 = vld [vmem:[#allocation10 + $0x1f0] sm:$0xff]
    %v1118 = vld [vmem:[#allocation10 + $0x1f8] sm:$0xff]
    %v1119 = vld [vmem:[#allocation10 + $0x200] sm:$0xff]
    %v1120 = vld [vmem:[#allocation10 + $0x208] sm:$0xff]
    %v1121 = vld [vmem:[#allocation10 + $0x210] sm:$0xff]
    %v1122 = vld [vmem:[#allocation10 + $0x218] sm:$0xff]
    %v1123 = vld [vmem:[#allocation10 + $0x220] sm:$0xff]
    %v1124 = vld [vmem:[#allocation10 + $0x228] sm:$0xff]
    %v1125 = vld [vmem:[#allocation10 + $0x230] sm:$0xff]
    %v1126 = vld [vmem:[#allocation10 + $0x238] sm:$0xff]
    %v1127 = vld [vmem:[#allocation10 + $0x240] sm:$0xff]
    %v1128 = vld [vmem:[#allocation10 + $0x248] sm:$0xff]
    %v1129 = vld [vmem:[#allocation10 + $0x250] sm:$0xff]
    %v1130 = vld [vmem:[#allocation10 + $0x258] sm:$0xff]
    %v1131 = vld [vmem:[#allocation10 + $0x260] sm:$0xff]
    %v1132 = vld [vmem:[#allocation10 + $0x268] sm:$0xff]
    %v1133 = vld [vmem:[#allocation10 + $0x270] sm:$0xff]
    %v1134 = vld [vmem:[#allocation10 + $0x278] sm:$0xff]
    %v1215 = vunpack.c.l.b16 %v1055
    %v1216 = vunpack.c.h.b16 %v1055
    %v1217 = vunpack.c.l.b16 %v1056
    %v1218 = vunpack.c.h.b16 %v1056
    %v1219 = vunpack.c.l.b16 %v1057
    %v1220 = vunpack.c.h.b16 %v1057
    %v1221 = vunpack.c.l.b16 %v1058
    %v1222 = vunpack.c.h.b16 %v1058
    %v1223 = vunpack.c.l.b16 %v1059
    %v1224 = vunpack.c.h.b16 %v1059
    %v1225 = vunpack.c.l.b16 %v1060
    %v1226 = vunpack.c.h.b16 %v1060
    %v1227 = vunpack.c.l.b16 %v1061
    %v1228 = vunpack.c.h.b16 %v1061
    %v1229 = vunpack.c.l.b16 %v1062
    %v1230 = vunpack.c.h.b16 %v1062
    %v1231 = vunpack.c.l.b16 %v1063
    %v1232 = vunpack.c.h.b16 %v1063
    %v1233 = vunpack.c.l.b16 %v1064
    %v1234 = vunpack.c.h.b16 %v1064
    %v1235 = vunpack.c.l.b16 %v1065
    %v1236 = vunpack.c.h.b16 %v1065
    %v1237 = vunpack.c.l.b16 %v1066
    %v1238 = vunpack.c.h.b16 %v1066
    %v1239 = vunpack.c.l.b16 %v1067
    %v1240 = vunpack.c.h.b16 %v1067
    %v1241 = vunpack.c.l.b16 %v1068
    %v1242 = vunpack.c.h.b16 %v1068
    %v1243 = vunpack.c.l.b16 %v1069
    %v1244 = vunpack.c.h.b16 %v1069
    %v1245 = vunpack.c.l.b16 %v1070
    %v1246 = vunpack.c.h.b16 %v1070
    %v1247 = vunpack.c.l.b16 %v1071
    %v1248 = vunpack.c.h.b16 %v1071
    %v1249 = vunpack.c.l.b16 %v1072
    %v1250 = vunpack.c.h.b16 %v1072
    %v1251 = vunpack.c.l.b16 %v1073
    %v1252 = vunpack.c.h.b16 %v1073
    %v1253 = vunpack.c.l.b16 %v1074
    %v1254 = vunpack.c.h.b16 %v1074
    %v1255 = vunpack.c.l.b16 %v1075
    %v1256 = vunpack.c.h.b16 %v1075
    %v1257 = vunpack.c.l.b16 %v1076
    %v1258 = vunpack.c.h.b16 %v1076
    %v1259 = vunpack.c.l.b16 %v1077
    %v1260 = vunpack.c.h.b16 %v1077
    %v1261 = vunpack.c.l.b16 %v1078
    %v1262 = vunpack.c.h.b16 %v1078
    %v1263 = vunpack.c.l.b16 %v1079
    %v1264 = vunpack.c.h.b16 %v1079
    %v1265 = vunpack.c.l.b16 %v1080
    %v1266 = vunpack.c.h.b16 %v1080
    %v1267 = vunpack.c.l.b16 %v1081
    %v1268 = vunpack.c.h.b16 %v1081
    %v1269 = vunpack.c.l.b16 %v1082
    %v1270 = vunpack.c.h.b16 %v1082
    %v1271 = vunpack.c.l.b16 %v1083
    %v1272 = vunpack.c.h.b16 %v1083
    %v1273 = vunpack.c.l.b16 %v1084
    %v1274 = vunpack.c.h.b16 %v1084
    %v1275 = vunpack.c.l.b16 %v1085
    %v1276 = vunpack.c.h.b16 %v1085
    %v1277 = vunpack.c.l.b16 %v1086
    %v1278 = vunpack.c.h.b16 %v1086
    %v1279 = vunpack.c.l.b16 %v1087
    %v1280 = vunpack.c.h.b16 %v1087
    %v1281 = vunpack.c.l.b16 %v1088
    %v1282 = vunpack.c.h.b16 %v1088
    %v1283 = vunpack.c.l.b16 %v1089
    %v1284 = vunpack.c.h.b16 %v1089
    %v1285 = vunpack.c.l.b16 %v1090
    %v1286 = vunpack.c.h.b16 %v1090
    %v1287 = vunpack.c.l.b16 %v1091
    %v1288 = vunpack.c.h.b16 %v1091
    %v1289 = vunpack.c.l.b16 %v1092
    %v1290 = vunpack.c.h.b16 %v1092
    %v1291 = vunpack.c.l.b16 %v1093
    %v1292 = vunpack.c.h.b16 %v1093
    %v1293 = vunpack.c.l.b16 %v1094
    %v1294 = vunpack.c.h.b16 %v1094
    %v1295 = vunpack.c.l.b16 %v1095
    %v1296 = vunpack.c.h.b16 %v1095
    %v1297 = vunpack.c.l.b16 %v1096
    %v1298 = vunpack.c.h.b16 %v1096
    %v1299 = vunpack.c.l.b16 %v1097
    %v1300 = vunpack.c.h.b16 %v1097
    %v1301 = vunpack.c.l.b16 %v1098
    %v1302 = vunpack.c.h.b16 %v1098
    %v1303 = vunpack.c.l.b16 %v1099
    %v1304 = vunpack.c.h.b16 %v1099
    %v1305 = vunpack.c.l.b16 %v1100
    %v1306 = vunpack.c.h.b16 %v1100
    %v1307 = vunpack.c.l.b16 %v1101
    %v1308 = vunpack.c.h.b16 %v1101
    %v1309 = vunpack.c.l.b16 %v1102
    %v1310 = vunpack.c.h.b16 %v1102
    %v1311 = vunpack.c.l.b16 %v1103
    %v1312 = vunpack.c.h.b16 %v1103
    %v1313 = vunpack.c.l.b16 %v1104
    %v1314 = vunpack.c.h.b16 %v1104
    %v1315 = vunpack.c.l.b16 %v1105
    %v1316 = vunpack.c.h.b16 %v1105
    %v1317 = vunpack.c.l.b16 %v1106
    %v1318 = vunpack.c.h.b16 %v1106
    %v1319 = vunpack.c.l.b16 %v1107
    %v1320 = vunpack.c.h.b16 %v1107
    %v1321 = vunpack.c.l.b16 %v1108
    %v1322 = vunpack.c.h.b16 %v1108
    %v1323 = vunpack.c.l.b16 %v1109
    %v1324 = vunpack.c.h.b16 %v1109
    %v1325 = vunpack.c.l.b16 %v1110
    %v1326 = vunpack.c.h.b16 %v1110
    %v1327 = vunpack.c.l.b16 %v1111
    %v1328 = vunpack.c.h.b16 %v1111
    %v1329 = vunpack.c.l.b16 %v1112
    %v1330 = vunpack.c.h.b16 %v1112
    %v1331 = vunpack.c.l.b16 %v1113
    %v1332 = vunpack.c.h.b16 %v1113
    %v1333 = vunpack.c.l.b16 %v1114
    %v1334 = vunpack.c.h.b16 %v1114
    %v1335 = vunpack.c.l.b16 %v1115
    %v1336 = vunpack.c.h.b16 %v1115
    %v1337 = vunpack.c.l.b16 %v1116
    %v1338 = vunpack.c.h.b16 %v1116
    %v1339 = vunpack.c.l.b16 %v1117
    %v1340 = vunpack.c.h.b16 %v1117
    %v1341 = vunpack.c.l.b16 %v1118
    %v1342 = vunpack.c.h.b16 %v1118
    %v1343 = vunpack.c.l.b16 %v1119
    %v1344 = vunpack.c.h.b16 %v1119
    %v1345 = vunpack.c.l.b16 %v1120
    %v1346 = vunpack.c.h.b16 %v1120
    %v1347 = vunpack.c.l.b16 %v1121
    %v1348 = vunpack.c.h.b16 %v1121
    %v1349 = vunpack.c.l.b16 %v1122
    %v1350 = vunpack.c.h.b16 %v1122
    %v1351 = vunpack.c.l.b16 %v1123
    %v1352 = vunpack.c.h.b16 %v1123
    %v1353 = vunpack.c.l.b16 %v1124
    %v1354 = vunpack.c.h.b16 %v1124
    %v1355 = vunpack.c.l.b16 %v1125
    %v1356 = vunpack.c.h.b16 %v1125
    %v1357 = vunpack.c.l.b16 %v1126
    %v1358 = vunpack.c.h.b16 %v1126
    %v1359 = vunpack.c.l.b16 %v1127
    %v1360 = vunpack.c.h.b16 %v1127
    %v1361 = vunpack.c.l.b16 %v1128
    %v1362 = vunpack.c.h.b16 %v1128
    %v1363 = vunpack.c.l.b16 %v1129
    %v1364 = vunpack.c.h.b16 %v1129
    %v1365 = vunpack.c.l.b16 %v1130
    %v1366 = vunpack.c.h.b16 %v1130
    %v1367 = vunpack.c.l.b16 %v1131
    %v1368 = vunpack.c.h.b16 %v1131
    %v1369 = vunpack.c.l.b16 %v1132
    %v1370 = vunpack.c.h.b16 %v1132
    %v1371 = vunpack.c.l.b16 %v1133
    %v1372 = vunpack.c.h.b16 %v1133
    %v1373 = vunpack.c.l.b16 %v1134
    %v1374 = vunpack.c.h.b16 %v1134
    %v1375 = vpack.c.b16 %v1217, %v1215
    %v1376 = vpack.c.b16 %v1218, %v1216
    %v1377 = vpack.c.b16 %v1221, %v1219
    %v1378 = vpack.c.b16 %v1222, %v1220
    %v1379 = vpack.c.b16 %v1225, %v1223
    %v1380 = vpack.c.b16 %v1226, %v1224
    %v1381 = vpack.c.b16 %v1229, %v1227
    %v1382 = vpack.c.b16 %v1230, %v1228
    %v1383 = vpack.c.b16 %v1233, %v1231
    %v1384 = vpack.c.b16 %v1234, %v1232
    %v1385 = vpack.c.b16 %v1237, %v1235
    %v1386 = vpack.c.b16 %v1238, %v1236
    %v1387 = vpack.c.b16 %v1241, %v1239
    %v1388 = vpack.c.b16 %v1242, %v1240
    %v1389 = vpack.c.b16 %v1245, %v1243
    %v1390 = vpack.c.b16 %v1246, %v1244
    %v1391 = vpack.c.b16 %v1249, %v1247
    %v1392 = vpack.c.b16 %v1250, %v1248
    %v1393 = vpack.c.b16 %v1253, %v1251
    %v1394 = vpack.c.b16 %v1254, %v1252
    %v1395 = vpack.c.b16 %v1257, %v1255
    %v1396 = vpack.c.b16 %v1258, %v1256
    %v1397 = vpack.c.b16 %v1261, %v1259
    %v1398 = vpack.c.b16 %v1262, %v1260
    %v1399 = vpack.c.b16 %v1265, %v1263
    %v1400 = vpack.c.b16 %v1266, %v1264
    %v1401 = vpack.c.b16 %v1269, %v1267
    %v1402 = vpack.c.b16 %v1270, %v1268
    %v1403 = vpack.c.b16 %v1273, %v1271
    %v1404 = vpack.c.b16 %v1274, %v1272
    %v1405 = vpack.c.b16 %v1277, %v1275
    %v1406 = vpack.c.b16 %v1278, %v1276
    %v1407 = vpack.c.b16 %v1281, %v1279
    %v1408 = vpack.c.b16 %v1282, %v1280
    %v1409 = vpack.c.b16 %v1285, %v1283
    %v1410 = vpack.c.b16 %v1286, %v1284
    %v1411 = vpack.c.b16 %v1289, %v1287
    %v1412 = vpack.c.b16 %v1290, %v1288
    %v1413 = vpack.c.b16 %v1293, %v1291
    %v1414 = vpack.c.b16 %v1294, %v1292
    %v1415 = vpack.c.b16 %v1297, %v1295
    %v1416 = vpack.c.b16 %v1298, %v1296
    %v1417 = vpack.c.b16 %v1301, %v1299
    %v1418 = vpack.c.b16 %v1302, %v1300
    %v1419 = vpack.c.b16 %v1305, %v1303
    %v1420 = vpack.c.b16 %v1306, %v1304
    %v1421 = vpack.c.b16 %v1309, %v1307
    %v1422 = vpack.c.b16 %v1310, %v1308
    %v1423 = vpack.c.b16 %v1313, %v1311
    %v1424 = vpack.c.b16 %v1314, %v1312
    %v1425 = vpack.c.b16 %v1317, %v1315
    %v1426 = vpack.c.b16 %v1318, %v1316
    %v1427 = vpack.c.b16 %v1321, %v1319
    %v1428 = vpack.c.b16 %v1322, %v1320
    %v1429 = vpack.c.b16 %v1325, %v1323
    %v1430 = vpack.c.b16 %v1326, %v1324
    %v1431 = vpack.c.b16 %v1329, %v1327
    %v1432 = vpack.c.b16 %v1330, %v1328
    %v1433 = vpack.c.b16 %v1333, %v1331
    %v1434 = vpack.c.b16 %v1334, %v1332
    %v1435 = vpack.c.b16 %v1337, %v1335
    %v1436 = vpack.c.b16 %v1338, %v1336
    %v1437 = vpack.c.b16 %v1341, %v1339
    %v1438 = vpack.c.b16 %v1342, %v1340
    %v1439 = vpack.c.b16 %v1345, %v1343
    %v1440 = vpack.c.b16 %v1346, %v1344
    %v1441 = vpack.c.b16 %v1349, %v1347
    %v1442 = vpack.c.b16 %v1350, %v1348
    %v1443 = vpack.c.b16 %v1353, %v1351
    %v1444 = vpack.c.b16 %v1354, %v1352
    %v1445 = vpack.c.b16 %v1357, %v1355
    %v1446 = vpack.c.b16 %v1358, %v1356
    %v1447 = vpack.c.b16 %v1361, %v1359
    %v1448 = vpack.c.b16 %v1362, %v1360
    %v1449 = vpack.c.b16 %v1365, %v1363
    %v1450 = vpack.c.b16 %v1366, %v1364
    %v1451 = vpack.c.b16 %v1369, %v1367
    %v1452 = vpack.c.b16 %v1370, %v1368
    %v1453 = vpack.c.b16 %v1373, %v1371
    %v1454 = vpack.c.b16 %v1374, %v1372
    %1535 = vmatprep.subr.bf16.mxu0 %v1376
    %1536 = vmatpush1.bf16.msra.mxu0 %v1375
    %1537 = vmatprep.subr.bf16.mxu0 %v1378
    %1538 = vmatpush1.bf16.msra.mxu0 %v1377
    %1539 = vmatprep.subr.bf16.mxu0 %v1380
    %1540 = vmatpush1.bf16.msra.mxu0 %v1379
    %1541 = vmatprep.subr.bf16.mxu0 %v1382
    %1542 = vmatpush1.bf16.msra.mxu0 %v1381
    %1543 = vmatprep.subr.bf16.mxu0 %v1384
    %1544 = vmatpush1.bf16.msra.mxu0 %v1383
    %1545 = vmatprep.subr.bf16.mxu0 %v1386
    %1546 = vmatpush1.bf16.msra.mxu0 %v1385
    %1547 = vmatprep.subr.bf16.mxu0 %v1388
    %1548 = vmatpush1.bf16.msra.mxu0 %v1387
    %1549 = vmatprep.subr.bf16.mxu0 %v1390
    %1550 = vmatpush1.bf16.msra.mxu0 %v1389
    %1551 = vmatprep.subr.bf16.mxu0 %v1392
    %1552 = vmatpush1.bf16.msra.mxu0 %v1391
    %1553 = vmatprep.subr.bf16.mxu0 %v1394
    %1554 = vmatpush1.bf16.msra.mxu0 %v1393
    %1555 = vmatprep.subr.bf16.mxu0 %v1396
    %1556 = vmatpush1.bf16.msra.mxu0 %v1395
    %1557 = vmatprep.subr.bf16.mxu0 %v1398
    %1558 = vmatpush1.bf16.msra.mxu0 %v1397
    %1559 = vmatprep.subr.bf16.mxu0 %v1400
    %1560 = vmatpush1.bf16.msra.mxu0 %v1399
    %1561 = vmatprep.subr.bf16.mxu0 %v1402
    %1562 = vmatpush1.bf16.msra.mxu0 %v1401
    %1563 = vmatprep.subr.bf16.mxu0 %v1404
    %1564 = vmatpush1.bf16.msra.mxu0 %v1403
    %1565 = vmatprep.subr.bf16.mxu0 %v1406
    %1566 = vmatpush1.bf16.msra.mxu0 %v1405
    %1567 = vmatprep.mubr.bf16.mxu0 %v1036
    %1568 = vmatmul.mubr.bf16.gmra.mrb[0].mxu0 %v1035
    %v1569 = vpop.f32.mrb[0].mxu0
    %v1570 = vadd.f32 0.0, %v1569
    %v1571 = vpop.f32.mrb[0].mxu0
    %v1572 = vadd.f32 0.0, %v1571
    %v1573 = vpop.f32.mrb[0].mxu0
    %v1574 = vadd.f32 0.0, %v1573
    %v1575 = vpop.f32.mrb[0].mxu0
    %v1576 = vadd.f32 0.0, %v1575
    %1577 = vmatprep.mubr.bf16.mxu0 %v1041
    %1578 = vmatmul.mubr.bf16.gmra.mrb[0].mxu0 %v1040
    %v1579 = vpop.f32.mrb[0].mxu0
    %v1580 = vadd.f32 0.0, %v1579
    %v1581 = vpop.f32.mrb[0].mxu0
    %v1582 = vadd.f32 0.0, %v1581
    %v1583 = vpop.f32.mrb[0].mxu0
    %v1584 = vadd.f32 0.0, %v1583
    %v1585 = vpop.f32.mrb[0].mxu0
    %v1586 = vadd.f32 0.0, %v1585
    %1587 = vmatprep.mubr.bf16.mxu0 %v1046
    %1588 = vmatmul.mubr.bf16.gmra.mrb[0].mxu0 %v1045
    %v1589 = vpop.f32.mrb[0].mxu0
    %v1590 = vadd.f32 0.0, %v1589
    %v1591 = vpop.f32.mrb[0].mxu0
    %v1592 = vadd.f32 0.0, %v1591
    %v1593 = vpop.f32.mrb[0].mxu0
    %v1594 = vadd.f32 0.0, %v1593
    %v1595 = vpop.f32.mrb[0].mxu0
    %v1596 = vadd.f32 0.0, %v1595
    %1597 = vmatprep.mubr.bf16.mxu0 %v1051
    %1598 = vmatmul.mubr.bf16.gmra.mrb[0].mxu0 %v1050
    %v1599 = vpop.f32.mrb[0].mxu0
    %v1600 = vadd.f32 0.0, %v1599
    %v1601 = vpop.f32.mrb[0].mxu0
    %v1602 = vadd.f32 0.0, %v1601
    %v1603 = vpop.f32.mrb[0].mxu0
    %v1604 = vadd.f32 0.0, %v1603
    %v1605 = vpop.f32.mrb[0].mxu0
    %v1606 = vadd.f32 0.0, %v1605
    %1607 = vdwg.mxu0
    %1608 = vmatprep.subr.bf16.mxu0 %v1408
    %1609 = vmatpush1.bf16.msra.mxu0 %v1407
    %1610 = vmatprep.subr.bf16.mxu0 %v1410
    %1611 = vmatpush1.bf16.msra.mxu0 %v1409
    %1612 = vmatprep.subr.bf16.mxu0 %v1412
    %1613 = vmatpush1.bf16.msra.mxu0 %v1411
    %1614 = vmatprep.subr.bf16.mxu0 %v1414
    %1615 = vmatpush1.bf16.msra.mxu0 %v1413
    %1616 = vmatprep.subr.bf16.mxu0 %v1416
    %1617 = vmatpush1.bf16.msra.mxu0 %v1415
    %1618 = vmatprep.subr.bf16.mxu0 %v1418
    %1619 = vmatpush1.bf16.msra.mxu0 %v1417
    %1620 = vmatprep.subr.bf16.mxu0 %v1420
    %1621 = vmatpush1.bf16.msra.mxu0 %v1419
    %1622 = vmatprep.subr.bf16.mxu0 %v1422
    %1623 = vmatpush1.bf16.msra.mxu0 %v1421
    %1624 = vmatprep.subr.bf16.mxu0 %v1424
    %1625 = vmatpush1.bf16.msra.mxu0 %v1423
    %1626 = vmatprep.subr.bf16.mxu0 %v1426
    %1627 = vmatpush1.bf16.msra.mxu0 %v1425
    %1628 = vmatprep.subr.bf16.mxu0 %v1428
    %1629 = vmatpush1.bf16.msra.mxu0 %v1427
    %1630 = vmatprep.subr.bf16.mxu0 %v1430
    %1631 = vmatpush1.bf16.msra.mxu0 %v1429
    %1632 = vmatprep.subr.bf16.mxu0 %v1432
    %1633 = vmatpush1.bf16.msra.mxu0 %v1431
    %1634 = vmatprep.subr.bf16.mxu0 %v1434
    %1635 = vmatpush1.bf16.msra.mxu0 %v1433
    %1636 = vmatprep.subr.bf16.mxu0 %v1436
    %1637 = vmatpush1.bf16.msra.mxu0 %v1435
    %1638 = vmatprep.subr.bf16.mxu0 %v1438
    %1639 = vmatpush1.bf16.msra.mxu0 %v1437
    %1640 = vmatprep.mubr.bf16.mxu0 %v1038
    %1641 = vmatmul.mubr.bf16.gmra.mrb[0].mxu0 %v1037
    %v1642 = vpop.f32.mrb[0].mxu0
    %v1643 = vadd.f32 %v1570, %v1642
    %v1644 = vpop.f32.mrb[0].mxu0
    %v1645 = vadd.f32 %v1572, %v1644
    %v1646 = vpop.f32.mrb[0].mxu0
    %v1647 = vadd.f32 %v1574, %v1646
    %v1648 = vpop.f32.mrb[0].mxu0
    %v1649 = vadd.f32 %v1576, %v1648
    %1650 = vmatprep.mubr.bf16.mxu0 %v1043
    %1651 = vmatmul.mubr.bf16.gmra.mrb[0].mxu0 %v1042
    %v1652 = vpop.f32.mrb[0].mxu0
    %v1653 = vadd.f32 %v1580, %v1652
    %v1654 = vpop.f32.mrb[0].mxu0
    %v1655 = vadd.f32 %v1582, %v1654
    %v1656 = vpop.f32.mrb[0].mxu0
    %v1657 = vadd.f32 %v1584, %v1656
    %v1658 = vpop.f32.mrb[0].mxu0
    %v1659 = vadd.f32 %v1586, %v1658
    %1660 = vmatprep.mubr.bf16.mxu0 %v1048
    %1661 = vmatmul.mubr.bf16.gmra.mrb[0].mxu0 %v1047
    %v1662 = vpop.f32.mrb[0].mxu0
    %v1663 = vadd.f32 %v1590, %v1662
    %v1664 = vpop.f32.mrb[0].mxu0
    %v1665 = vadd.f32 %v1592, %v1664
    %v1666 = vpop.f32.mrb[0].mxu0
    %v1667 = vadd.f32 %v1594, %v1666
    %v1668 = vpop.f32.mrb[0].mxu0
    %v1669 = vadd.f32 %v1596, %v1668
    %1670 = vmatprep.mubr.bf16.mxu0 %v1053
    %1671 = vmatmul.mubr.bf16.gmra.mrb[0].mxu0 %v1052
    %v1672 = vpop.f32.mrb[0].mxu0
    %v1673 = vadd.f32 %v1600, %v1672
    %v1674 = vpop.f32.mrb[0].mxu0
    %v1675 = vadd.f32 %v1602, %v1674
    %v1676 = vpop.f32.mrb[0].mxu0
    %v1677 = vadd.f32 %v1604, %v1676
    %v1678 = vpop.f32.mrb[0].mxu0
    %v1679 = vadd.f32 %v1606, %v1678
    %1680 = vdwg.mxu0
    %1681 = vmatprep.subr.bf16.mxu0 %v1440
    %1682 = vmatpush1.bf16.msra.mxu0 %v1439
    %1683 = vmatprep.subr.bf16.mxu0 %v1442
    %1684 = vmatpush1.bf16.msra.mxu0 %v1441
    %1685 = vmatprep.subr.bf16.mxu0 %v1444
    %1686 = vmatpush1.bf16.msra.mxu0 %v1443
    %1687 = vmatprep.subr.bf16.mxu0 %v1446
    %1688 = vmatpush1.bf16.msra.mxu0 %v1445
    %1689 = vmatprep.subr.bf16.mxu0 %v1448
    %1690 = vmatpush1.bf16.msra.mxu0 %v1447
    %1691 = vmatprep.subr.bf16.mxu0 %v1450
    %1692 = vmatpush1.bf16.msra.mxu0 %v1449
    %1693 = vmatprep.subr.bf16.mxu0 %v1452
    %1694 = vmatpush1.bf16.msra.mxu0 %v1451
    %1695 = vmatprep.subr.bf16.mxu0 %v1454
    %1696 = vmatpush1.bf16.msra.mxu0 %v1453
    %1697 = vmatprep.subr.bf16.mxu0 0
    %1698 = vmatpush1.bf16.msra.mxu0 0
    %1699 = vmatprep.subr.bf16.mxu0 0
    %1700 = vmatpush1.bf16.msra.mxu0 0
    %1701 = vmatprep.subr.bf16.mxu0 0
    %1702 = vmatpush1.bf16.msra.mxu0 0
    %1703 = vmatprep.subr.bf16.mxu0 0
    %1704 = vmatpush1.bf16.msra.mxu0 0
    %1705 = vmatprep.subr.bf16.mxu0 0
    %1706 = vmatpush1.bf16.msra.mxu0 0
    %1707 = vmatprep.subr.bf16.mxu0 0
    %1708 = vmatpush1.bf16.msra.mxu0 0
    %1709 = vmatprep.subr.bf16.mxu0 0
    %1710 = vmatpush1.bf16.msra.mxu0 0
    %1711 = vmatprep.subr.bf16.mxu0 0
    %1712 = vmatpush1.bf16.msra.mxu0 0
    %1713 = vmatprep.mubr.bf16.mxu0 0
    %1714 = vmatmul.mubr.bf16.gmra.mrb[0].mxu0 %v1039
    %v1715 = vpop.f32.mrb[0].mxu0
    %v1716 = vadd.f32 %v1643, %v1715
    %v1717 = vpop.f32.mrb[0].mxu0
    %v1718 = vadd.f32 %v1645, %v1717
    %v1719 = vpop.f32.mrb[0].mxu0
    %v1720 = vadd.f32 %v1647, %v1719
    %v1721 = vpop.f32.mrb[0].mxu0
    %v1722 = vadd.f32 %v1649, %v1721
    %1723 = vmatprep.mubr.bf16.mxu0 0
    %1724 = vmatmul.mubr.bf16.gmra.mrb[0].mxu0 %v1044
    %v1725 = vpop.f32.mrb[0].mxu0
    %v1726 = vadd.f32 %v1653, %v1725
    %v1727 = vpop.f32.mrb[0].mxu0
    %v1728 = vadd.f32 %v1655, %v1727
    %v1729 = vpop.f32.mrb[0].mxu0
    %v1730 = vadd.f32 %v1657, %v1729
    %v1731 = vpop.f32.mrb[0].mxu0
    %v1732 = vadd.f32 %v1659, %v1731
    %1733 = vmatprep.mubr.bf16.mxu0 0
    %1734 = vmatmul.mubr.bf16.gmra.mrb[0].mxu0 %v1049
    %v1735 = vpop.f32.mrb[0].mxu0
    %v1736 = vadd.f32 %v1663, %v1735
    %v1737 = vpop.f32.mrb[0].mxu0
    %v1738 = vadd.f32 %v1665, %v1737
    %v1739 = vpop.f32.mrb[0].mxu0
    %v1740 = vadd.f32 %v1667, %v1739
    %v1741 = vpop.f32.mrb[0].mxu0
    %v1742 = vadd.f32 %v1669, %v1741
    %1743 = vmatprep.mubr.bf16.mxu0 0
    %1744 = vmatmul.mubr.bf16.gmra.mrb[0].mxu0 %v1054
    %v1745 = vpop.f32.mrb[0].mxu0
    %v1746 = vadd.f32 %v1673, %v1745
    %v1747 = vpop.f32.mrb[0].mxu0
    %v1748 = vadd.f32 %v1675, %v1747
    %v1749 = vpop.f32.mrb[0].mxu0
    %v1750 = vadd.f32 %v1677, %v1749
    %v1751 = vpop.f32.mrb[0].mxu0
    %v1752 = vadd.f32 %v1679, %v1751
    %1753 = vdwg.mxu0
    %vm1754 = vcmp.lt.s32.totalorder %v797, 21
    %vm1755 = vcmp.lt.s32.totalorder %v798, 21
    %vm1756 = vcmp.lt.s32.totalorder %v799, 21
    %vm1757 = vcmp.lt.s32.totalorder %v800, 21
    %v1758 = vsel %vm1754, 1, 0
    %v1759 = vsel %vm1755, 1, 0
    %v1760 = vsel %vm1756, 1, 0
    %v1761 = vsel %vm1757, 1, 0
    %vm1762 = vcmp.eq.s32.totalorder %v1758, 1
    %vm1763 = vcmp.eq.s32.totalorder %v1759, 1
    %vm1764 = vcmp.eq.s32.totalorder %v1760, 1
    %vm1765 = vcmp.eq.s32.totalorder %v1761, 1
    %v1766 = vsel %vm1762, %v1716, 0.0
    %v1767 = vsel %vm1762, %v1718, 0.0
    %v1768 = vsel %vm1763, %v1720, 0.0
    %v1769 = vsel %vm1763, %v1722, 0.0
    %v1770 = vsel %vm1764, %v1726, 0.0
    %v1771 = vsel %vm1764, %v1728, 0.0
    %v1772 = vsel %vm1765, %v1730, 0.0
    %v1773 = vsel %vm1765, %v1732, 0.0
    %v1774 = vsel %vm1762, %v1736, 0.0
    %v1775 = vsel %vm1762, %v1738, 0.0
    %v1776 = vsel %vm1763, %v1740, 0.0
    %v1777 = vsel %vm1763, %v1742, 0.0
    %v1778 = vsel %vm1764, %v1746, 0.0
    %v1779 = vsel %vm1764, %v1748, 0.0
    %v1780 = vsel %vm1765, %v1750, 0.0
    %v1781 = vsel %vm1765, %v1752, 0.0
    %v1782 = vadd.f32 %v1766, %v1768
    %v1783 = vadd.f32 %v1782, %v1770
    %v1784 = vadd.f32 %v1783, %v1772
    %v1785 = vadd.f32 %v1784, %v1774
    %v1786 = vadd.f32 %v1785, %v1776
    %v1787 = vadd.f32 %v1786, %v1778
    %v1788 = vadd.f32 %v1787, %v1780
    %v1789 = vrot.slane %v1788, 4
    %v1790 = vadd.f32 %v1788, %v1789
    %v1791 = vrot.slane %v1790, 2
    %v1792 = vadd.f32 %v1790, %v1791
    %v1793 = vrot.slane %v1792, 1
    %v1794 = vadd.f32 %v1792, %v1793
    %v1795 = vadd.f32 %v1767, %v1769
    %v1796 = vadd.f32 %v1795, %v1771
    %v1797 = vadd.f32 %v1796, %v1773
    %v1798 = vadd.f32 %v1797, %v1775
    %v1799 = vadd.f32 %v1798, %v1777
    %v1800 = vadd.f32 %v1799, %v1779
    %v1801 = vadd.f32 %v1800, %v1781
    %v1802 = vrot.slane %v1801, 4
    %v1803 = vadd.f32 %v1801, %v1802
    %v1804 = vrot.slane %v1803, 2
    %v1805 = vadd.f32 %v1803, %v1804
    %v1806 = vrot.slane %v1805, 1
    %v1807 = vadd.f32 %v1805, %v1806
    %v1808 = vmul.f32 %v1794, 0.023809524
    %v1809 = vmul.f32 %v1807, 0.023809524
    %v1810 = vmul.f32 %v1766, %v1766
    %v1811 = vmul.f32 %v1767, %v1767
    %v1812 = vmul.f32 %v1768, %v1768
    %v1813 = vmul.f32 %v1769, %v1769
    %v1814 = vmul.f32 %v1770, %v1770
    %v1815 = vmul.f32 %v1771, %v1771
    %v1816 = vmul.f32 %v1772, %v1772
    %v1817 = vmul.f32 %v1773, %v1773
    %v1818 = vmul.f32 %v1774, %v1774
    %v1819 = vmul.f32 %v1775, %v1775
    %v1820 = vmul.f32 %v1776, %v1776
    %v1821 = vmul.f32 %v1777, %v1777
    %v1822 = vmul.f32 %v1778, %v1778
    %v1823 = vmul.f32 %v1779, %v1779
    %v1824 = vmul.f32 %v1780, %v1780
    %v1825 = vmul.f32 %v1781, %v1781
    %v1826 = vadd.f32 %v1810, %v1812
    %v1827 = vadd.f32 %v1826, %v1814
    %v1828 = vadd.f32 %v1827, %v1816
    %v1829 = vadd.f32 %v1828, %v1818
    %v1830 = vadd.f32 %v1829, %v1820
    %v1831 = vadd.f32 %v1830, %v1822
    %v1832 = vadd.f32 %v1831, %v1824
    %v1833 = vrot.slane %v1832, 4
    %v1834 = vadd.f32 %v1832, %v1833
    %v1835 = vrot.slane %v1834, 2
    %v1836 = vadd.f32 %v1834, %v1835
    %v1837 = vrot.slane %v1836, 1
    %v1838 = vadd.f32 %v1836, %v1837
    %v1839 = vadd.f32 %v1811, %v1813
    %v1840 = vadd.f32 %v1839, %v1815
    %v1841 = vadd.f32 %v1840, %v1817
    %v1842 = vadd.f32 %v1841, %v1819
    %v1843 = vadd.f32 %v1842, %v1821
    %v1844 = vadd.f32 %v1843, %v1823
    %v1845 = vadd.f32 %v1844, %v1825
    %v1846 = vrot.slane %v1845, 4
    %v1847 = vadd.f32 %v1845, %v1846
    %v1848 = vrot.slane %v1847, 2
    %v1849 = vadd.f32 %v1847, %v1848
    %v1850 = vrot.slane %v1849, 1
    %v1851 = vadd.f32 %v1849, %v1850
    %v1852 = vmul.f32 %v1838, 0.023809524
    %v1853 = vmul.f32 %v1851, 0.023809524
    %v1854 = vmul.f32 %v1808, %v1808
    %v1855 = vmul.f32 %v1809, %v1809
    %v1856 = vsub.f32 %v1852, %v1854
    %v1857 = vsub.f32 %v1853, %v1855
    %v1858 = vmax.f32 %v1856, 0.0
    %v1859 = vmax.f32 %v1857, 0.0
    %v1860 = vld [vmem:[#allocation11] sm:$0x3]
    %v1861 = vadd.f32 %v1858, 1e-05
    %v1862 = vadd.f32 %v1859, 1e-05
    %v1863 = vrsqrt.pop %v1861
    %v1864 = vrsqrt.pop %v1862
    %v1867 = vcombine.low %v1863, %v1864
    %v1869 = vunpack.c.l.s4 1966171168
    %v1870 = vunpack.c.0.s8 %v1869
    %v1871 = vlaneseq
    %v1872 = vshrl.u32 %v1871, 7
    %v1873 = vsub.s32 %v1870, %v1872
    %v1874 = vrot.slane %v1867, %v1873
    %v1876 = vunpack.c.l.s4 1966171168
    %v1877 = vunpack.c.0.s8 %v1876
    %v1878 = vlaneseq
    %v1879 = vshrl.u32 %v1878, 7
    %v1880 = vsub.s32 %v1877, %v1879
    %v1881 = vrot.slane %v1874, %v1880
    %v1883 = vmul.f32 %v1860, %v1881
    %v1884 = vld [vmem:[#allocation13] sm:$0x3]
    %v1886 = vlaneseq
    %v1887 = vshrl.u32 %v1886, 7
    %v1888 = vsub.s32 0, %v1887
    %v1889 = vrot.slane %v1883, %v1888
    %v1890 = vlaneseq
    %v1891 = vshrl.u32 %v1890, 7
    %v1892 = vsub.s32 1, %v1891
    %v1893 = vrot.slane %v1883, %v1892
    %v1896 = vmul.f32 %v1808, %v1889
    %v1897 = vmul.f32 %v1809, %v1893
    %v1900 = vcombine.low %v1896, %v1897
    %v1902 = vunpack.c.l.s4 1966171168
    %v1903 = vunpack.c.0.s8 %v1902
    %v1904 = vlaneseq
    %v1905 = vshrl.u32 %v1904, 7
    %v1906 = vsub.s32 %v1903, %v1905
    %v1907 = vrot.slane %v1900, %v1906
    %v1909 = vunpack.c.l.s4 1966171168
    %v1910 = vunpack.c.0.s8 %v1909
    %v1911 = vlaneseq
    %v1912 = vshrl.u32 %v1911, 7
    %v1913 = vsub.s32 %v1910, %v1912
    %v1914 = vrot.slane %v1907, %v1913
    %v1916 = vsub.f32 %v1884, %v1914
    %v1917 = vmul.f32 %v1766, %v1889
    %v1918 = vmul.f32 %v1767, %v1893
    %v1919 = vmul.f32 %v1768, %v1889
    %v1920 = vmul.f32 %v1769, %v1893
    %v1921 = vmul.f32 %v1770, %v1889
    %v1922 = vmul.f32 %v1771, %v1893
    %v1923 = vmul.f32 %v1772, %v1889
    %v1924 = vmul.f32 %v1773, %v1893
    %v1925 = vmul.f32 %v1774, %v1889
    %v1926 = vmul.f32 %v1775, %v1893
    %v1927 = vmul.f32 %v1776, %v1889
    %v1928 = vmul.f32 %v1777, %v1893
    %v1929 = vmul.f32 %v1778, %v1889
    %v1930 = vmul.f32 %v1779, %v1893
    %v1931 = vmul.f32 %v1780, %v1889
    %v1932 = vmul.f32 %v1781, %v1893
    %v1934 = vlaneseq
    %v1935 = vshrl.u32 %v1934, 7
    %v1936 = vsub.s32 0, %v1935
    %v1937 = vrot.slane %v1916, %v1936
    %v1938 = vlaneseq
    %v1939 = vshrl.u32 %v1938, 7
    %v1940 = vsub.s32 1, %v1939
    %v1941 = vrot.slane %v1916, %v1940
    %v1944 = vadd.f32 %v1917, %v1937
    %v1945 = vadd.f32 %v1918, %v1941
    %v1946 = vadd.f32 %v1919, %v1937
    %v1947 = vadd.f32 %v1920, %v1941
    %v1948 = vadd.f32 %v1921, %v1937
    %v1949 = vadd.f32 %v1922, %v1941
    %v1950 = vadd.f32 %v1923, %v1937
    %v1951 = vadd.f32 %v1924, %v1941
    %v1952 = vadd.f32 %v1925, %v1937
    %v1953 = vadd.f32 %v1926, %v1941
    %v1954 = vadd.f32 %v1927, %v1937
    %v1955 = vadd.f32 %v1928, %v1941
    %v1956 = vadd.f32 %v1929, %v1937
    %v1957 = vadd.f32 %v1930, %v1941
    %v1958 = vadd.f32 %v1931, %v1937
    %v1959 = vadd.f32 %v1932, %v1941
    %v1960 = vmax.f32 %v1944, 0.0
    %v1961 = vmax.f32 %v1945, 0.0
    %v1962 = vmax.f32 %v1946, 0.0
    %v1963 = vmax.f32 %v1947, 0.0
    %v1964 = vmax.f32 %v1948, 0.0
    %v1965 = vmax.f32 %v1949, 0.0
    %v1966 = vmax.f32 %v1950, 0.0
    %v1967 = vmax.f32 %v1951, 0.0
    %v1968 = vmax.f32 %v1952, 0.0
    %v1969 = vmax.f32 %v1953, 0.0
    %v1970 = vmax.f32 %v1954, 0.0
    %v1971 = vmax.f32 %v1955, 0.0
    %v1972 = vmax.f32 %v1956, 0.0
    %v1973 = vmax.f32 %v1957, 0.0
    %v1974 = vmax.f32 %v1958, 0.0
    %v1975 = vmax.f32 %v1959, 0.0
    %v1992 = vrot.slane %v1960, 1
    %v1993 = vrot.slane %v1962, 1
    %v1994 = vsel %vm216, %v1992, %v1993
    %v1995 = vrot.slane %v1961, 1
    %v1996 = vrot.slane %v1963, 1
    %v1997 = vsel %vm216, %v1995, %v1996
    %v1998 = vrot.slane %v1964, 1
    %v1999 = vsel %vm216, %v1993, %v1998
    %v2000 = vrot.slane %v1965, 1
    %v2001 = vsel %vm216, %v1996, %v2000
    %v2002 = vrot.slane %v1966, 1
    %v2003 = vsel %vm216, %v1998, %v2002
    %v2004 = vrot.slane %v1967, 1
    %v2005 = vsel %vm216, %v2000, %v2004
    %v2006 = vrot.slane %v1968, 1
    %v2007 = vrot.slane %v1970, 1
    %v2008 = vsel %vm216, %v2006, %v2007
    %v2009 = vrot.slane %v1969, 1
    %v2010 = vrot.slane %v1971, 1
    %v2011 = vsel %vm216, %v2009, %v2010
    %v2012 = vrot.slane %v1972, 1
    %v2013 = vsel %vm216, %v2007, %v2012
    %v2014 = vrot.slane %v1973, 1
    %v2015 = vsel %vm216, %v2010, %v2014
    %v2016 = vrot.slane %v1974, 1
    %v2017 = vsel %vm216, %v2012, %v2016
    %v2018 = vrot.slane %v1975, 1
    %v2019 = vsel %vm216, %v2014, %v2018
    %v2032 = vrot.slane %v1960, 2
    %v2033 = vrot.slane %v1962, 2
    %v2034 = vsel %vm269, %v2032, %v2033
    %v2035 = vrot.slane %v1961, 2
    %v2036 = vrot.slane %v1963, 2
    %v2037 = vsel %vm269, %v2035, %v2036
    %v2038 = vrot.slane %v1964, 2
    %v2039 = vsel %vm269, %v2033, %v2038
    %v2040 = vrot.slane %v1965, 2
    %v2041 = vsel %vm269, %v2036, %v2040
    %v2042 = vrot.slane %v1966, 2
    %v2043 = vsel %vm269, %v2038, %v2042
    %v2044 = vrot.slane %v1967, 2
    %v2045 = vsel %vm269, %v2040, %v2044
    %v2046 = vrot.slane %v1968, 2
    %v2047 = vrot.slane %v1970, 2
    %v2048 = vsel %vm269, %v2046, %v2047
    %v2049 = vrot.slane %v1969, 2
    %v2050 = vrot.slane %v1971, 2
    %v2051 = vsel %vm269, %v2049, %v2050
    %v2052 = vrot.slane %v1972, 2
    %v2053 = vsel %vm269, %v2047, %v2052
    %v2054 = vrot.slane %v1973, 2
    %v2055 = vsel %vm269, %v2050, %v2054
    %v2056 = vrot.slane %v1974, 2
    %v2057 = vsel %vm269, %v2052, %v2056
    %v2058 = vrot.slane %v1975, 2
    %v2059 = vsel %vm269, %v2054, %v2058
    %v2072 = vpack.c.bf16 %v1962, %v1960
    %v2073 = vpack.c.bf16 %v1963, %v1961
    %v2074 = vpack.c.bf16 %v1999, %v1994
    %v2075 = vpack.c.bf16 %v2001, %v1997
    %v2076 = vpack.c.bf16 %v2039, %v2034
    %v2077 = vpack.c.bf16 %v2041, %v2037
    %v2078 = vpack.c.bf16 %v1964, %v1964
    %v2079 = vpack.c.bf16 %v1965, %v1965
    %v2080 = vpack.c.bf16 %v2003, %v2003
    %v2081 = vpack.c.bf16 %v2005, %v2005
    %v2082 = vpack.c.bf16 %v2043, %v2043
    %v2083 = vpack.c.bf16 %v2045, %v2045
    %v2084 = vpack.c.bf16 %v1970, %v1968
    %v2085 = vpack.c.bf16 %v1971, %v1969
    %v2086 = vpack.c.bf16 %v2013, %v2008
    %v2087 = vpack.c.bf16 %v2015, %v2011
    %v2088 = vpack.c.bf16 %v2053, %v2048
    %v2089 = vpack.c.bf16 %v2055, %v2051
    %v2090 = vpack.c.bf16 %v1972, %v1972
    %v2091 = vpack.c.bf16 %v1973, %v1973
    %v2092 = vpack.c.bf16 %v2017, %v2017
    %v2093 = vpack.c.bf16 %v2019, %v2019
    %v2094 = vpack.c.bf16 %v2057, %v2057
    %v2095 = vpack.c.bf16 %v2059, %v2059
    %v2096 = vld [vmem:[#allocation14] sm:$0xf]
    %v2097 = vld [vmem:[#allocation14 + $0x4] sm:$0xf]
    %v2098 = vld [vmem:[#allocation14 + $0x8] sm:$0xf]
    %v2099 = vld [vmem:[#allocation14 + $0xc] sm:$0xf]
    %v2100 = vld [vmem:[#allocation14 + $0x10] sm:$0xf]
    %v2101 = vld [vmem:[#allocation14 + $0x14] sm:$0xf]
    %v2102 = vld [vmem:[#allocation14 + $0x18] sm:$0xf]
    %v2103 = vld [vmem:[#allocation14 + $0x1c] sm:$0xf]
    %v2104 = vld [vmem:[#allocation14 + $0x20] sm:$0xf]
    %v2105 = vld [vmem:[#allocation14 + $0x24] sm:$0xf]
    %v2106 = vld [vmem:[#allocation14 + $0x28] sm:$0xf]
    %v2107 = vld [vmem:[#allocation14 + $0x2c] sm:$0xf]
    %v2108 = vld [vmem:[#allocation14 + $0x30] sm:$0xf]
    %v2109 = vld [vmem:[#allocation14 + $0x34] sm:$0xf]
    %v2110 = vld [vmem:[#allocation14 + $0x38] sm:$0xf]
    %v2111 = vld [vmem:[#allocation14 + $0x3c] sm:$0xf]
    %v2112 = vld [vmem:[#allocation14 + $0x40] sm:$0xf]
    %v2113 = vld [vmem:[#allocation14 + $0x44] sm:$0xf]
    %v2114 = vld [vmem:[#allocation14 + $0x48] sm:$0xf]
    %v2115 = vld [vmem:[#allocation14 + $0x4c] sm:$0xf]
    %v2116 = vld [vmem:[#allocation14 + $0x50] sm:$0xf]
    %v2117 = vld [vmem:[#allocation14 + $0x54] sm:$0xf]
    %v2118 = vld [vmem:[#allocation14 + $0x58] sm:$0xf]
    %v2119 = vld [vmem:[#allocation14 + $0x5c] sm:$0xf]
    %v2120 = vld [vmem:[#allocation14 + $0x60] sm:$0xf]
    %v2121 = vld [vmem:[#allocation14 + $0x64] sm:$0xf]
    %v2122 = vld [vmem:[#allocation14 + $0x68] sm:$0xf]
    %v2123 = vld [vmem:[#allocation14 + $0x6c] sm:$0xf]
    %v2124 = vld [vmem:[#allocation14 + $0x70] sm:$0xf]
    %v2125 = vld [vmem:[#allocation14 + $0x74] sm:$0xf]
    %v2126 = vld [vmem:[#allocation14 + $0x78] sm:$0xf]
    %v2127 = vld [vmem:[#allocation14 + $0x7c] sm:$0xf]
    %v2128 = vld [vmem:[#allocation14 + $0x80] sm:$0xf]
    %v2129 = vld [vmem:[#allocation14 + $0x84] sm:$0xf]
    %v2130 = vld [vmem:[#allocation14 + $0x88] sm:$0xf]
    %v2131 = vld [vmem:[#allocation14 + $0x8c] sm:$0xf]
    %v2132 = vld [vmem:[#allocation14 + $0x90] sm:$0xf]
    %v2133 = vld [vmem:[#allocation14 + $0x94] sm:$0xf]
    %v2134 = vld [vmem:[#allocation14 + $0x98] sm:$0xf]
    %v2135 = vld [vmem:[#allocation14 + $0x9c] sm:$0xf]
    %v2136 = vld [vmem:[#allocation14 + $0xa0] sm:$0xf]
    %v2137 = vld [vmem:[#allocation14 + $0xa4] sm:$0xf]
    %v2138 = vld [vmem:[#allocation14 + $0xa8] sm:$0xf]
    %v2139 = vld [vmem:[#allocation14 + $0xac] sm:$0xf]
    %v2140 = vld [vmem:[#allocation14 + $0xb0] sm:$0xf]
    %v2141 = vld [vmem:[#allocation14 + $0xb4] sm:$0xf]
    %v2142 = vld [vmem:[#allocation14 + $0xb8] sm:$0xf]
    %v2143 = vld [vmem:[#allocation14 + $0xbc] sm:$0xf]
    %v2144 = vld [vmem:[#allocation14 + $0xc0] sm:$0xf]
    %v2145 = vld [vmem:[#allocation14 + $0xc4] sm:$0xf]
    %v2146 = vld [vmem:[#allocation14 + $0xc8] sm:$0xf]
    %v2147 = vld [vmem:[#allocation14 + $0xcc] sm:$0xf]
    %v2148 = vld [vmem:[#allocation14 + $0xd0] sm:$0xf]
    %v2149 = vld [vmem:[#allocation14 + $0xd4] sm:$0xf]
    %v2150 = vld [vmem:[#allocation14 + $0xd8] sm:$0xf]
    %v2151 = vld [vmem:[#allocation14 + $0xdc] sm:$0xf]
    %v2152 = vld [vmem:[#allocation14 + $0xe0] sm:$0xf]
    %v2153 = vld [vmem:[#allocation14 + $0xe4] sm:$0xf]
    %v2154 = vld [vmem:[#allocation14 + $0xe8] sm:$0xf]
    %v2155 = vld [vmem:[#allocation14 + $0xec] sm:$0xf]
    %v2156 = vld [vmem:[#allocation14 + $0xf0] sm:$0xf]
    %v2157 = vld [vmem:[#allocation14 + $0xf4] sm:$0xf]
    %v2158 = vld [vmem:[#allocation14 + $0xf8] sm:$0xf]
    %v2159 = vld [vmem:[#allocation14 + $0xfc] sm:$0xf]
    %v2160 = vld [vmem:[#allocation14 + $0x100] sm:$0xf]
    %v2161 = vld [vmem:[#allocation14 + $0x104] sm:$0xf]
    %v2162 = vld [vmem:[#allocation14 + $0x108] sm:$0xf]
    %v2163 = vld [vmem:[#allocation14 + $0x10c] sm:$0xf]
    %v2164 = vld [vmem:[#allocation14 + $0x110] sm:$0xf]
    %v2165 = vld [vmem:[#allocation14 + $0x114] sm:$0xf]
    %v2166 = vld [vmem:[#allocation14 + $0x118] sm:$0xf]
    %v2167 = vld [vmem:[#allocation14 + $0x11c] sm:$0xf]
    %v2168 = vld [vmem:[#allocation14 + $0x120] sm:$0xf]
    %v2169 = vld [vmem:[#allocation14 + $0x124] sm:$0xf]
    %v2170 = vld [vmem:[#allocation14 + $0x128] sm:$0xf]
    %v2171 = vld [vmem:[#allocation14 + $0x12c] sm:$0xf]
    %v2172 = vld [vmem:[#allocation14 + $0x130] sm:$0xf]
    %v2173 = vld [vmem:[#allocation14 + $0x134] sm:$0xf]
    %v2174 = vld [vmem:[#allocation14 + $0x138] sm:$0xf]
    %v2175 = vld [vmem:[#allocation14 + $0x13c] sm:$0xf]
    %v2176 = vld [vmem:[#allocation14 + $0x140] sm:$0xf]
    %v2177 = vld [vmem:[#allocation14 + $0x144] sm:$0xf]
    %v2178 = vld [vmem:[#allocation14 + $0x148] sm:$0xf]
    %v2179 = vld [vmem:[#allocation14 + $0x14c] sm:$0xf]
    %v2180 = vld [vmem:[#allocation14 + $0x150] sm:$0xf]
    %v2181 = vld [vmem:[#allocation14 + $0x154] sm:$0xf]
    %v2182 = vld [vmem:[#allocation14 + $0x158] sm:$0xf]
    %v2183 = vld [vmem:[#allocation14 + $0x15c] sm:$0xf]
    %v2184 = vld [vmem:[#allocation14 + $0x160] sm:$0xf]
    %v2185 = vld [vmem:[#allocation14 + $0x164] sm:$0xf]
    %v2186 = vld [vmem:[#allocation14 + $0x168] sm:$0xf]
    %v2187 = vld [vmem:[#allocation14 + $0x16c] sm:$0xf]
    %v2188 = vld [vmem:[#allocation14 + $0x170] sm:$0xf]
    %v2189 = vld [vmem:[#allocation14 + $0x174] sm:$0xf]
    %v2190 = vld [vmem:[#allocation14 + $0x178] sm:$0xf]
    %v2191 = vld [vmem:[#allocation14 + $0x17c] sm:$0xf]
    %v2216 = vunpack.c.l.b16 %v2072
    %v2217 = vunpack.c.l.b16 %v2073
    %v2218 = vunpack.c.l.b16 %v2074
    %v2219 = vunpack.c.l.b16 %v2075
    %v2220 = vunpack.c.l.b16 %v2076
    %v2221 = vunpack.c.l.b16 %v2077
    %v2222 = vunpack.c.h.b16 %v2072
    %v2223 = vunpack.c.h.b16 %v2073
    %v2224 = vunpack.c.h.b16 %v2074
    %v2225 = vunpack.c.h.b16 %v2075
    %v2226 = vunpack.c.h.b16 %v2076
    %v2227 = vunpack.c.h.b16 %v2077
    %v2228 = vunpack.c.l.b16 %v2078
    %v2229 = vunpack.c.l.b16 %v2079
    %v2230 = vunpack.c.l.b16 %v2080
    %v2231 = vunpack.c.l.b16 %v2081
    %v2232 = vunpack.c.l.b16 %v2082
    %v2233 = vunpack.c.l.b16 %v2083
    %v2234 = vunpack.c.l.b16 %v2084
    %v2235 = vunpack.c.l.b16 %v2085
    %v2236 = vunpack.c.l.b16 %v2086
    %v2237 = vunpack.c.l.b16 %v2087
    %v2238 = vunpack.c.l.b16 %v2088
    %v2239 = vunpack.c.l.b16 %v2089
    %v2240 = vunpack.c.h.b16 %v2084
    %v2241 = vunpack.c.h.b16 %v2085
    %v2242 = vunpack.c.h.b16 %v2086
    %v2243 = vunpack.c.h.b16 %v2087
    %v2244 = vunpack.c.h.b16 %v2088
    %v2245 = vunpack.c.h.b16 %v2089
    %v2246 = vunpack.c.l.b16 %v2090
    %v2247 = vunpack.c.l.b16 %v2091
    %v2248 = vunpack.c.l.b16 %v2092
    %v2249 = vunpack.c.l.b16 %v2093
    %v2250 = vunpack.c.l.b16 %v2094
    %v2251 = vunpack.c.l.b16 %v2095
    %v2252 = vpack.c.b16 %v2222, %v2216
    %v2253 = vpack.c.b16 %v2223, %v2217
    %v2254 = vpack.c.b16 %v2224, %v2218
    %v2255 = vpack.c.b16 %v2225, %v2219
    %v2256 = vpack.c.b16 %v2226, %v2220
    %v2257 = vpack.c.b16 %v2227, %v2221
    %v2258 = vpack.c.b16 %v2234, %v2228
    %v2259 = vpack.c.b16 %v2235, %v2229
    %v2260 = vpack.c.b16 %v2236, %v2230
    %v2261 = vpack.c.b16 %v2237, %v2231
    %v2262 = vpack.c.b16 %v2238, %v2232
    %v2263 = vpack.c.b16 %v2239, %v2233
    %v2264 = vpack.c.b16 %v2246, %v2240
    %v2265 = vpack.c.b16 %v2247, %v2241
    %v2266 = vpack.c.b16 %v2248, %v2242
    %v2267 = vpack.c.b16 %v2249, %v2243
    %v2268 = vpack.c.b16 %v2250, %v2244
    %v2269 = vpack.c.b16 %v2251, %v2245
    %v2384 = vunpack.c.l.b16 %v2096
    %v2385 = vunpack.c.l.b16 %v2097
    %v2386 = vunpack.c.l.b16 %v2098
    %v2387 = vunpack.c.l.b16 %v2099
    %v2388 = vunpack.c.l.b16 %v2100
    %v2389 = vunpack.c.l.b16 %v2101
    %v2390 = vunpack.c.l.b16 %v2102
    %v2391 = vunpack.c.l.b16 %v2103
    %v2392 = vunpack.c.l.b16 %v2104
    %v2393 = vunpack.c.l.b16 %v2105
    %v2394 = vunpack.c.l.b16 %v2106
    %v2395 = vunpack.c.l.b16 %v2107
    %v2396 = vunpack.c.l.b16 %v2108
    %v2397 = vunpack.c.l.b16 %v2109
    %v2398 = vunpack.c.l.b16 %v2110
    %v2399 = vunpack.c.l.b16 %v2111
    %v2400 = vunpack.c.l.b16 %v2112
    %v2401 = vunpack.c.l.b16 %v2113
    %v2402 = vunpack.c.l.b16 %v2114
    %v2403 = vunpack.c.l.b16 %v2115
    %v2404 = vunpack.c.l.b16 %v2116
    %v2405 = vunpack.c.l.b16 %v2117
    %v2406 = vunpack.c.l.b16 %v2118
    %v2407 = vunpack.c.l.b16 %v2119
    %v2408 = vunpack.c.l.b16 %v2120
    %v2409 = vunpack.c.l.b16 %v2121
    %v2410 = vunpack.c.l.b16 %v2122
    %v2411 = vunpack.c.l.b16 %v2123
    %v2412 = vunpack.c.l.b16 %v2124
    %v2413 = vunpack.c.l.b16 %v2125
    %v2414 = vunpack.c.l.b16 %v2126
    %v2415 = vunpack.c.l.b16 %v2127
    %v2416 = vunpack.c.l.b16 %v2128
    %v2417 = vunpack.c.l.b16 %v2129
    %v2418 = vunpack.c.l.b16 %v2130
    %v2419 = vunpack.c.l.b16 %v2131
    %v2420 = vunpack.c.l.b16 %v2132
    %v2421 = vunpack.c.l.b16 %v2133
    %v2422 = vunpack.c.l.b16 %v2134
    %v2423 = vunpack.c.l.b16 %v2135
    %v2424 = vunpack.c.l.b16 %v2136
    %v2425 = vunpack.c.l.b16 %v2137
    %v2426 = vunpack.c.l.b16 %v2138
    %v2427 = vunpack.c.l.b16 %v2139
    %v2428 = vunpack.c.l.b16 %v2140
    %v2429 = vunpack.c.l.b16 %v2141
    %v2430 = vunpack.c.l.b16 %v2142
    %v2431 = vunpack.c.l.b16 %v2143
    %v2432 = vunpack.c.l.b16 %v2144
    %v2433 = vunpack.c.l.b16 %v2145
    %v2434 = vunpack.c.l.b16 %v2146
    %v2435 = vunpack.c.l.b16 %v2147
    %v2436 = vunpack.c.l.b16 %v2148
    %v2437 = vunpack.c.l.b16 %v2149
    %v2438 = vunpack.c.l.b16 %v2150
    %v2439 = vunpack.c.l.b16 %v2151
    %v2440 = vunpack.c.l.b16 %v2152
    %v2441 = vunpack.c.l.b16 %v2153
    %v2442 = vunpack.c.l.b16 %v2154
    %v2443 = vunpack.c.l.b16 %v2155
    %v2444 = vunpack.c.l.b16 %v2156
    %v2445 = vunpack.c.l.b16 %v2157
    %v2446 = vunpack.c.l.b16 %v2158
    %v2447 = vunpack.c.l.b16 %v2159
    %v2448 = vunpack.c.l.b16 %v2160
    %v2449 = vunpack.c.l.b16 %v2161
    %v2450 = vunpack.c.l.b16 %v2162
    %v2451 = vunpack.c.l.b16 %v2163
    %v2452 = vunpack.c.l.b16 %v2164
    %v2453 = vunpack.c.l.b16 %v2165
    %v2454 = vunpack.c.l.b16 %v2166
    %v2455 = vunpack.c.l.b16 %v2167
    %v2456 = vunpack.c.l.b16 %v2168
    %v2457 = vunpack.c.l.b16 %v2169
    %v2458 = vunpack.c.l.b16 %v2170
    %v2459 = vunpack.c.l.b16 %v2171
    %v2460 = vunpack.c.l.b16 %v2172
    %v2461 = vunpack.c.l.b16 %v2173
    %v2462 = vunpack.c.l.b16 %v2174
    %v2463 = vunpack.c.l.b16 %v2175
    %v2464 = vunpack.c.l.b16 %v2176
    %v2465 = vunpack.c.l.b16 %v2177
    %v2466 = vunpack.c.l.b16 %v2178
    %v2467 = vunpack.c.l.b16 %v2179
    %v2468 = vunpack.c.l.b16 %v2180
    %v2469 = vunpack.c.l.b16 %v2181
    %v2470 = vunpack.c.l.b16 %v2182
    %v2471 = vunpack.c.l.b16 %v2183
    %v2472 = vunpack.c.l.b16 %v2184
    %v2473 = vunpack.c.l.b16 %v2185
    %v2474 = vunpack.c.l.b16 %v2186
    %v2475 = vunpack.c.l.b16 %v2187
    %v2476 = vunpack.c.l.b16 %v2188
    %v2477 = vunpack.c.l.b16 %v2189
    %v2478 = vunpack.c.l.b16 %v2190
    %v2479 = vunpack.c.l.b16 %v2191
    %v2480 = vpack.c.b16 %v2385, %v2384
    %v2481 = vpack.c.b16 %v2387, %v2386
    %v2482 = vpack.c.b16 %v2389, %v2388
    %v2483 = vpack.c.b16 %v2391, %v2390
    %v2484 = vpack.c.b16 %v2393, %v2392
    %v2485 = vpack.c.b16 %v2395, %v2394
    %v2486 = vpack.c.b16 %v2397, %v2396
    %v2487 = vpack.c.b16 %v2399, %v2398
    %v2488 = vpack.c.b16 %v2401, %v2400
    %v2489 = vpack.c.b16 %v2403, %v2402
    %v2490 = vpack.c.b16 %v2405, %v2404
    %v2491 = vpack.c.b16 %v2407, %v2406
    %v2492 = vpack.c.b16 %v2409, %v2408
    %v2493 = vpack.c.b16 %v2411, %v2410
    %v2494 = vpack.c.b16 %v2413, %v2412
    %v2495 = vpack.c.b16 %v2415, %v2414
    %v2496 = vpack.c.b16 %v2417, %v2416
    %v2497 = vpack.c.b16 %v2419, %v2418
    %v2498 = vpack.c.b16 %v2421, %v2420
    %v2499 = vpack.c.b16 %v2423, %v2422
    %v2500 = vpack.c.b16 %v2425, %v2424
    %v2501 = vpack.c.b16 %v2427, %v2426
    %v2502 = vpack.c.b16 %v2429, %v2428
    %v2503 = vpack.c.b16 %v2431, %v2430
    %v2504 = vpack.c.b16 %v2433, %v2432
    %v2505 = vpack.c.b16 %v2435, %v2434
    %v2506 = vpack.c.b16 %v2437, %v2436
    %v2507 = vpack.c.b16 %v2439, %v2438
    %v2508 = vpack.c.b16 %v2441, %v2440
    %v2509 = vpack.c.b16 %v2443, %v2442
    %v2510 = vpack.c.b16 %v2445, %v2444
    %v2511 = vpack.c.b16 %v2447, %v2446
    %v2512 = vpack.c.b16 %v2449, %v2448
    %v2513 = vpack.c.b16 %v2451, %v2450
    %v2514 = vpack.c.b16 %v2453, %v2452
    %v2515 = vpack.c.b16 %v2455, %v2454
    %v2516 = vpack.c.b16 %v2457, %v2456
    %v2517 = vpack.c.b16 %v2459, %v2458
    %v2518 = vpack.c.b16 %v2461, %v2460
    %v2519 = vpack.c.b16 %v2463, %v2462
    %v2520 = vpack.c.b16 %v2465, %v2464
    %v2521 = vpack.c.b16 %v2467, %v2466
    %v2522 = vpack.c.b16 %v2469, %v2468
    %v2523 = vpack.c.b16 %v2471, %v2470
    %v2524 = vpack.c.b16 %v2473, %v2472
    %v2525 = vpack.c.b16 %v2475, %v2474
    %v2526 = vpack.c.b16 %v2477, %v2476
    %v2527 = vpack.c.b16 %v2479, %v2478
    %2576 = vmatprep.subr.bf16.mxu0 0
    %2577 = vmatpush1.bf16.msra.mxu0 %v2480
    %2578 = vmatprep.subr.bf16.mxu0 0
    %2579 = vmatpush1.bf16.msra.mxu0 %v2481
    %2580 = vmatprep.subr.bf16.mxu0 0
    %2581 = vmatpush1.bf16.msra.mxu0 %v2482
    %2582 = vmatprep.subr.bf16.mxu0 0
    %2583 = vmatpush1.bf16.msra.mxu0 %v2483
    %2584 = vmatprep.subr.bf16.mxu0 0
    %2585 = vmatpush1.bf16.msra.mxu0 %v2484
    %2586 = vmatprep.subr.bf16.mxu0 0
    %2587 = vmatpush1.bf16.msra.mxu0 %v2485
    %2588 = vmatprep.subr.bf16.mxu0 0
    %2589 = vmatpush1.bf16.msra.mxu0 %v2486
    %2590 = vmatprep.subr.bf16.mxu0 0
    %2591 = vmatpush1.bf16.msra.mxu0 %v2487
    %2592 = vmatprep.subr.bf16.mxu0 0
    %2593 = vmatpush1.bf16.msra.mxu0 %v2488
    %2594 = vmatprep.subr.bf16.mxu0 0
    %2595 = vmatpush1.bf16.msra.mxu0 %v2489
    %2596 = vmatprep.subr.bf16.mxu0 0
    %2597 = vmatpush1.bf16.msra.mxu0 %v2490
    %2598 = vmatprep.subr.bf16.mxu0 0
    %2599 = vmatpush1.bf16.msra.mxu0 %v2491
    %2600 = vmatprep.subr.bf16.mxu0 0
    %2601 = vmatpush1.bf16.msra.mxu0 %v2492
    %2602 = vmatprep.subr.bf16.mxu0 0
    %2603 = vmatpush1.bf16.msra.mxu0 %v2493
    %2604 = vmatprep.subr.bf16.mxu0 0
    %2605 = vmatpush1.bf16.msra.mxu0 %v2494
    %2606 = vmatprep.subr.bf16.mxu0 0
    %2607 = vmatpush1.bf16.msra.mxu0 %v2495
    %2608 = vmatprep.mubr.bf16.mxu0 %v2253
    %2609 = vmatmul.mubr.bf16.gmra.mrb[0].mxu0 %v2252
    %v2610 = vpop.f32.mrb[0].mxu0
    %v2611 = vadd.f32 0.0, %v2610
    %v2612 = vpop.f32.mrb[0].mxu0
    %v2613 = vpop.f32.mrb[0].mxu0
    %v2614 = vadd.f32 0.0, %v2613
    %v2615 = vpop.f32.mrb[0].mxu0
    %2616 = vmatprep.mubr.bf16.mxu0 %v2259
    %2617 = vmatmul.mubr.bf16.gmra.mrb[0].mxu0 %v2258
    %v2618 = vpop.f32.mrb[0].mxu0
    %v2619 = vadd.f32 0.0, %v2618
    %v2620 = vpop.f32.mrb[0].mxu0
    %v2621 = vpop.f32.mrb[0].mxu0
    %v2622 = vadd.f32 0.0, %v2621
    %v2623 = vpop.f32.mrb[0].mxu0
    %2624 = vmatprep.mubr.bf16.mxu0 %v2265
    %2625 = vmatmul.mubr.bf16.gmra.mrb[0].mxu0 %v2264
    %v2626 = vpop.f32.mrb[0].mxu0
    %v2627 = vadd.f32 0.0, %v2626
    %v2628 = vpop.f32.mrb[0].mxu0
    %v2629 = vpop.f32.mrb[0].mxu0
    %v2630 = vadd.f32 0.0, %v2629
    %v2631 = vpop.f32.mrb[0].mxu0
    %2632 = vdwg.mxu0
    %2633 = vmatprep.subr.bf16.mxu0 0
    %2634 = vmatpush1.bf16.msra.mxu0 %v2496
    %2635 = vmatprep.subr.bf16.mxu0 0
    %2636 = vmatpush1.bf16.msra.mxu0 %v2497
    %2637 = vmatprep.subr.bf16.mxu0 0
    %2638 = vmatpush1.bf16.msra.mxu0 %v2498
    %2639 = vmatprep.subr.bf16.mxu0 0
    %2640 = vmatpush1.bf16.msra.mxu0 %v2499
    %2641 = vmatprep.subr.bf16.mxu0 0
    %2642 = vmatpush1.bf16.msra.mxu0 %v2500
    %2643 = vmatprep.subr.bf16.mxu0 0
    %2644 = vmatpush1.bf16.msra.mxu0 %v2501
    %2645 = vmatprep.subr.bf16.mxu0 0
    %2646 = vmatpush1.bf16.msra.mxu0 %v2502
    %2647 = vmatprep.subr.bf16.mxu0 0
    %2648 = vmatpush1.bf16.msra.mxu0 %v2503
    %2649 = vmatprep.subr.bf16.mxu0 0
    %2650 = vmatpush1.bf16.msra.mxu0 %v2504
    %2651 = vmatprep.subr.bf16.mxu0 0
    %2652 = vmatpush1.bf16.msra.mxu0 %v2505
    %2653 = vmatprep.subr.bf16.mxu0 0
    %2654 = vmatpush1.bf16.msra.mxu0 %v2506
    %2655 = vmatprep.subr.bf16.mxu0 0
    %2656 = vmatpush1.bf16.msra.mxu0 %v2507
    %2657 = vmatprep.subr.bf16.mxu0 0
    %2658 = vmatpush1.bf16.msra.mxu0 %v2508
    %2659 = vmatprep.subr.bf16.mxu0 0
    %2660 = vmatpush1.bf16.msra.mxu0 %v2509
    %2661 = vmatprep.subr.bf16.mxu0 0
    %2662 = vmatpush1.bf16.msra.mxu0 %v2510
    %2663 = vmatprep.subr.bf16.mxu0 0
    %2664 = vmatpush1.bf16.msra.mxu0 %v2511
    %2665 = vmatprep.mubr.bf16.mxu0 %v2255
    %2666 = vmatmul.mubr.bf16.gmra.mrb[0].mxu0 %v2254
    %v2667 = vpop.f32.mrb[0].mxu0
    %v2668 = vadd.f32 %v2611, %v2667
    %v2669 = vpop.f32.mrb[0].mxu0
    %v2670 = vpop.f32.mrb[0].mxu0
    %v2671 = vadd.f32 %v2614, %v2670
    %v2672 = vpop.f32.mrb[0].mxu0
    %2673 = vmatprep.mubr.bf16.mxu0 %v2261
    %2674 = vmatmul.mubr.bf16.gmra.mrb[0].mxu0 %v2260
    %v2675 = vpop.f32.mrb[0].mxu0
    %v2676 = vadd.f32 %v2619, %v2675
    %v2677 = vpop.f32.mrb[0].mxu0
    %v2678 = vpop.f32.mrb[0].mxu0
    %v2679 = vadd.f32 %v2622, %v2678
    %v2680 = vpop.f32.mrb[0].mxu0
    %2681 = vmatprep.mubr.bf16.mxu0 %v2267
    %2682 = vmatmul.mubr.bf16.gmra.mrb[0].mxu0 %v2266
    %v2683 = vpop.f32.mrb[0].mxu0
    %v2684 = vadd.f32 %v2627, %v2683
    %v2685 = vpop.f32.mrb[0].mxu0
    %v2686 = vpop.f32.mrb[0].mxu0
    %v2687 = vadd.f32 %v2630, %v2686
    %v2688 = vpop.f32.mrb[0].mxu0
    %2689 = vdwg.mxu0
    %2690 = vmatprep.subr.bf16.mxu0 0
    %2691 = vmatpush1.bf16.msra.mxu0 %v2512
    %2692 = vmatprep.subr.bf16.mxu0 0
    %2693 = vmatpush1.bf16.msra.mxu0 %v2513
    %2694 = vmatprep.subr.bf16.mxu0 0
    %2695 = vmatpush1.bf16.msra.mxu0 %v2514
    %2696 = vmatprep.subr.bf16.mxu0 0
    %2697 = vmatpush1.bf16.msra.mxu0 %v2515
    %2698 = vmatprep.subr.bf16.mxu0 0
    %2699 = vmatpush1.bf16.msra.mxu0 %v2516
    %2700 = vmatprep.subr.bf16.mxu0 0
    %2701 = vmatpush1.bf16.msra.mxu0 %v2517
    %2702 = vmatprep.subr.bf16.mxu0 0
    %2703 = vmatpush1.bf16.msra.mxu0 %v2518
    %2704 = vmatprep.subr.bf16.mxu0 0
    %2705 = vmatpush1.bf16.msra.mxu0 %v2519
    %2706 = vmatprep.subr.bf16.mxu0 0
    %2707 = vmatpush1.bf16.msra.mxu0 %v2520
    %2708 = vmatprep.subr.bf16.mxu0 0
    %2709 = vmatpush1.bf16.msra.mxu0 %v2521
    %2710 = vmatprep.subr.bf16.mxu0 0
    %2711 = vmatpush1.bf16.msra.mxu0 %v2522
    %2712 = vmatprep.subr.bf16.mxu0 0
    %2713 = vmatpush1.bf16.msra.mxu0 %v2523
    %2714 = vmatprep.subr.bf16.mxu0 0
    %2715 = vmatpush1.bf16.msra.mxu0 %v2524
    %2716 = vmatprep.subr.bf16.mxu0 0
    %2717 = vmatpush1.bf16.msra.mxu0 %v2525
    %2718 = vmatprep.subr.bf16.mxu0 0
    %2719 = vmatpush1.bf16.msra.mxu0 %v2526
    %2720 = vmatprep.subr.bf16.mxu0 0
    %2721 = vmatpush1.bf16.msra.mxu0 %v2527
    %2722 = vmatprep.mubr.bf16.mxu0 %v2257
    %2723 = vmatmul.mubr.bf16.gmra.mrb[0].mxu0 %v2256
    %v2724 = vpop.f32.mrb[0].mxu0
    %v2725 = vadd.f32 %v2668, %v2724
    %v2726 = vpop.f32.mrb[0].mxu0
    %v2727 = vpop.f32.mrb[0].mxu0
    %v2728 = vadd.f32 %v2671, %v2727
    %v2729 = vpop.f32.mrb[0].mxu0
    %2730 = vmatprep.mubr.bf16.mxu0 %v2263
    %2731 = vmatmul.mubr.bf16.gmra.mrb[0].mxu0 %v2262
    %v2732 = vpop.f32.mrb[0].mxu0
    %v2733 = vadd.f32 %v2676, %v2732
    %v2734 = vpop.f32.mrb[0].mxu0
    %v2735 = vpop.f32.mrb[0].mxu0
    %v2736 = vadd.f32 %v2679, %v2735
    %v2737 = vpop.f32.mrb[0].mxu0
    %2738 = vmatprep.mubr.bf16.mxu0 %v2269
    %2739 = vmatmul.mubr.bf16.gmra.mrb[0].mxu0 %v2268
    %v2740 = vpop.f32.mrb[0].mxu0
    %v2741 = vadd.f32 %v2684, %v2740
    %v2742 = vpop.f32.mrb[0].mxu0
    %v2743 = vpop.f32.mrb[0].mxu0
    %v2744 = vadd.f32 %v2687, %v2743
    %v2745 = vpop.f32.mrb[0].mxu0
    %2746 = vdwg.mxu0
    %vm2747 = vcmp.lt.s32.totalorder %v797, 19
    %vm2748 = vcmp.lt.s32.totalorder %v798, 19
    %vm2749 = vcmp.lt.s32.totalorder %v799, 19
    %v2750 = vsel %vm2747, 1, 0
    %v2751 = vsel %vm2748, 1, 0
    %v2752 = vsel %vm2749, 1, 0
    %vm2753 = vcmp.eq.s32.totalorder %v2750, 1
    %vm2754 = vcmp.eq.s32.totalorder %v2751, 1
    %vm2755 = vcmp.eq.s32.totalorder %v2752, 1
    %v2756 = vsel %vm2753, %v2725, 0.0
    %v2757 = vsel %vm2754, %v2728, 0.0
    %v2758 = vsel %vm2755, %v2733, 0.0
    %v2759 = vsel %vm2753, %v2736, 0.0
    %v2760 = vsel %vm2754, %v2741, 0.0
    %v2761 = vsel %vm2755, %v2744, 0.0
    %v2762 = vadd.f32 %v2756, %v2757
    %v2763 = vadd.f32 %v2762, %v2758
    %v2764 = vadd.f32 %v2763, %v2759
    %v2765 = vadd.f32 %v2764, %v2760
    %v2766 = vadd.f32 %v2765, %v2761
    %v2767 = vrot.slane %v2766, 4
    %v2768 = vadd.f32 %v2766, %v2767
    %v2769 = vrot.slane %v2768, 2
    %v2770 = vadd.f32 %v2768, %v2769
    %v2771 = vrot.slane %v2770, 1
    %v2772 = vadd.f32 %v2770, %v2771
    %v2773 = vmul.f32 %v2772, 0.02631579
    %v2774 = vmul.f32 %v2756, %v2756
    %v2775 = vmul.f32 %v2757, %v2757
    %v2776 = vmul.f32 %v2758, %v2758
    %v2777 = vmul.f32 %v2759, %v2759
    %v2778 = vmul.f32 %v2760, %v2760
    %v2779 = vmul.f32 %v2761, %v2761
    %v2780 = vadd.f32 %v2774, %v2775
    %v2781 = vadd.f32 %v2780, %v2776
    %v2782 = vadd.f32 %v2781, %v2777
    %v2783 = vadd.f32 %v2782, %v2778
    %v2784 = vadd.f32 %v2783, %v2779
    %v2785 = vrot.slane %v2784, 4
    %v2786 = vadd.f32 %v2784, %v2785
    %v2787 = vrot.slane %v2786, 2
    %v2788 = vadd.f32 %v2786, %v2787
    %v2789 = vrot.slane %v2788, 1
    %v2790 = vadd.f32 %v2788, %v2789
    %v2791 = vmul.f32 %v2790, 0.02631579
    %v2792 = vmul.f32 %v2773, %v2773
    %v2793 = vsub.f32 %v2791, %v2792
    %v2794 = vmax.f32 %v2793, 0.0
    %v2795 = vld [vmem:[#allocation16] sm:$0x1]
    %v2796 = vadd.f32 %v2794, 1e-05
    %v2797 = vrsqrt.pop %v2796
    %v2798 = vmul.f32 %v2795, %v2797
    %v2799 = vld [vmem:[#allocation17] sm:$0x1]
    %v2800 = vmul.f32 %v2773, %v2798
    %v2801 = vsub.f32 %v2799, %v2800
    %v2803 = vlaneseq
    %v2804 = vshrl.u32 %v2803, 7
    %v2805 = vsub.s32 0, %v2804
    %v2806 = vrot.slane %v2798, %v2805
    %v2808 = vmul.f32 %v2756, %v2806
    %v2809 = vmul.f32 %v2757, %v2806
    %v2810 = vmul.f32 %v2758, %v2806
    %v2811 = vmul.f32 %v2759, %v2806
    %v2812 = vmul.f32 %v2760, %v2806
    %v2813 = vmul.f32 %v2761, %v2806
    %v2815 = vlaneseq
    %v2816 = vshrl.u32 %v2815, 7
    %v2817 = vsub.s32 0, %v2816
    %v2818 = vrot.slane %v2801, %v2817
    %v2820 = vadd.f32 %v2808, %v2818
    %v2821 = vadd.f32 %v2809, %v2818
    %v2822 = vadd.f32 %v2810, %v2818
    %v2823 = vadd.f32 %v2811, %v2818
    %v2824 = vadd.f32 %v2812, %v2818
    %v2825 = vadd.f32 %v2813, %v2818
    %v2826 = vmax.f32 %v2820, 0.0
    %v2827 = vmax.f32 %v2821, 0.0
    %v2828 = vmax.f32 %v2822, 0.0
    %v2829 = vmax.f32 %v2823, 0.0
    %v2830 = vmax.f32 %v2824, 0.0
    %v2831 = vmax.f32 %v2825, 0.0
    %v2832 = vsel %vm2753, %v2826, 0.0
    %v2833 = vsel %vm2754, %v2827, 0.0
    %v2834 = vsel %vm2755, %v2828, 0.0
    %v2835 = vsel %vm2753, %v2829, 0.0
    %v2836 = vsel %vm2754, %v2830, 0.0
    %v2837 = vsel %vm2755, %v2831, 0.0
    %v2838 = vadd.f32 %v2832, %v2833
    %v2839 = vadd.f32 %v2838, %v2834
    %v2840 = vrot.slane %v2839, 4
    %v2841 = vadd.f32 %v2839, %v2840
    %v2842 = vrot.slane %v2841, 2
    %v2843 = vadd.f32 %v2841, %v2842
    %v2844 = vrot.slane %v2843, 1
    %v2845 = vadd.f32 %v2843, %v2844
    %v2846 = vadd.f32 %v2835, %v2836
    %v2847 = vadd.f32 %v2846, %v2837
    %v2848 = vrot.slane %v2847, 4
    %v2849 = vadd.f32 %v2847, %v2848
    %v2850 = vrot.slane %v2849, 2
    %v2851 = vadd.f32 %v2849, %v2850
    %v2852 = vrot.slane %v2851, 1
    %v2853 = vadd.f32 %v2851, %v2852
    %v2854 = vmul.f32 %v2845, 0.05263158
    %v2855 = vmul.f32 %v2853, 0.05263158
    %v2856 = vpack.c.bf16 %v2854, %v2854
    %v2857 = vpack.c.bf16 %v2855, %v2855
    %v2858 = vld [vmem:[#allocation19] sm:$0xf]
    %v2859 = vld [vmem:[#allocation19 + $0x4] sm:$0xf]
    %v2860 = vld [vmem:[#allocation19 + $0x8] sm:$0xf]
    %v2861 = vld [vmem:[#allocation19 + $0xc] sm:$0xf]
    %v2862 = vld [vmem:[#allocation19 + $0x10] sm:$0xf]
    %v2863 = vld [vmem:[#allocation19 + $0x14] sm:$0xf]
    %v2864 = vld [vmem:[#allocation19 + $0x18] sm:$0xf]
    %v2865 = vld [vmem:[#allocation19 + $0x1c] sm:$0xf]
    %v2866 = vld [vmem:[#allocation19 + $0x20] sm:$0xf]
    %v2867 = vld [vmem:[#allocation19 + $0x24] sm:$0xf]
    %v2868 = vld [vmem:[#allocation19 + $0x28] sm:$0xf]
    %v2869 = vld [vmem:[#allocation19 + $0x2c] sm:$0xf]
    %v2870 = vld [vmem:[#allocation19 + $0x30] sm:$0xf]
    %v2871 = vld [vmem:[#allocation19 + $0x34] sm:$0xf]
    %v2872 = vld [vmem:[#allocation19 + $0x38] sm:$0xf]
    %v2873 = vld [vmem:[#allocation19 + $0x3c] sm:$0xf]
    %v2874 = vld [vmem:[#allocation20] sm:$0x1]
    %v2876 = vlaneseq
    %v2877 = vshrl.u32 %v2876, 7
    %v2878 = vsub.s32 0, %v2877
    %v2879 = vrot.slane %v2874, %v2878
    %v2883 = vunpack.c.l.b16 %v2856
    %v2884 = vunpack.c.l.b16 %v2857
    %vm2885 = vcmask 1041409
    %v2886 = vsel %vm2885, %v2884, %v2883
    %v2887 = vpack.c.b16 %v2886, %v2886
    %v2905 = vunpack.c.l.b16 %v2858
    %v2906 = vunpack.c.l.b16 %v2859
    %v2907 = vunpack.c.l.b16 %v2860
    %v2908 = vunpack.c.l.b16 %v2861
    %v2909 = vunpack.c.l.b16 %v2862
    %v2910 = vunpack.c.l.b16 %v2863
    %v2911 = vunpack.c.l.b16 %v2864
    %v2912 = vunpack.c.l.b16 %v2865
    %v2913 = vunpack.c.l.b16 %v2866
    %v2914 = vunpack.c.l.b16 %v2867
    %v2915 = vunpack.c.l.b16 %v2868
    %v2916 = vunpack.c.l.b16 %v2869
    %v2917 = vunpack.c.l.b16 %v2870
    %v2918 = vunpack.c.l.b16 %v2871
    %v2919 = vunpack.c.l.b16 %v2872
    %v2920 = vunpack.c.l.b16 %v2873
    %v2921 = vpack.c.b16 %v2906, %v2905
    %v2922 = vpack.c.b16 %v2908, %v2907
    %v2923 = vpack.c.b16 %v2910, %v2909
    %v2924 = vpack.c.b16 %v2912, %v2911
    %v2925 = vpack.c.b16 %v2914, %v2913
    %v2926 = vpack.c.b16 %v2916, %v2915
    %v2927 = vpack.c.b16 %v2918, %v2917
    %v2928 = vpack.c.b16 %v2920, %v2919
    %2937 = vmatprep.subr.bf16.mxu0 0
    %2938 = vmatpush1.bf16.msra.mxu0 %v2921
    %2939 = vmatprep.subr.bf16.mxu0 0
    %2940 = vmatpush1.bf16.msra.mxu0 %v2922
    %2941 = vmatprep.subr.bf16.mxu0 0
    %2942 = vmatpush1.bf16.msra.mxu0 %v2923
    %2943 = vmatprep.subr.bf16.mxu0 0
    %2944 = vmatpush1.bf16.msra.mxu0 %v2924
    %2945 = vmatprep.subr.bf16.mxu0 0
    %2946 = vmatpush1.bf16.msra.mxu0 %v2925
    %2947 = vmatprep.subr.bf16.mxu0 0
    %2948 = vmatpush1.bf16.msra.mxu0 %v2926
    %2949 = vmatprep.subr.bf16.mxu0 0
    %2950 = vmatpush1.bf16.msra.mxu0 %v2927
    %2951 = vmatprep.subr.bf16.mxu0 0
    %2952 = vmatpush1.bf16.msra.mxu0 %v2928
    %2953 = vmatprep.subr.bf16.mxu0 0
    %2954 = vmatpush1.bf16.msra.mxu0 0
    %2955 = vmatprep.subr.bf16.mxu0 0
    %2956 = vmatpush1.bf16.msra.mxu0 0
    %2957 = vmatprep.subr.bf16.mxu0 0
    %2958 = vmatpush1.bf16.msra.mxu0 0
    %2959 = vmatprep.subr.bf16.mxu0 0
    %2960 = vmatpush1.bf16.msra.mxu0 0
    %2961 = vmatprep.subr.bf16.mxu0 0
    %2962 = vmatpush1.bf16.msra.mxu0 0
    %2963 = vmatprep.subr.bf16.mxu0 0
    %2964 = vmatpush1.bf16.msra.mxu0 0
    %2965 = vmatprep.subr.bf16.mxu0 0
    %2966 = vmatpush1.bf16.msra.mxu0 0
    %2967 = vmatprep.subr.bf16.mxu0 0
    %2968 = vmatpush1.bf16.msra.mxu0 0
    %2969 = vmatprep.mubr.bf16.mxu0 0
    %2970 = vmatmul.mubr.bf16.gmra.mrb[0].mxu0 %v2887
    %v2971 = vpop.f32.mrb[0].mxu0
    %v2972 = vadd.f32 %v2879, %v2971
    %v2973 = vpop.f32.mrb[0].mxu0
    %v2974 = vpop.f32.mrb[0].mxu0
    %v2975 = vpop.f32.mrb[0].mxu0
    %2976 = vdwg.mxu0
    %2977 = vst [vmem:[#allocation22] sm:$0x3] %v2972
    // Predicated region
    $region98: #{tpu_custom_call.1} parent=1 // pred_check
      _
    $region99: #{tpu_custom_call.1} parent=1 // pred_check_branch
      %2979 = sbr.rel (0) target = $region101
    $region100: #{tpu_custom_call.1} parent=1 // pred_region
      %s2981 = ssub.s32 32, 32
      %2982 = vsyncadd [#allocation4], %s2981
      %s2984 = sshll.u32 [#allocation22], 4
      %s2985 = int_to_ptr.vmem [resolvable:$true] %s2984
      %2987 = dma.vmem_to_hbm [thread:$0]  %s2985, 32, %s12, [#allocation4]
    $region101: #{tpu_custom_call.1} parent=1 // pred_fallthru
      _
    // Predicated region
    $region102: #{tpu_custom_call.1} parent=1 // pred_check
      _
    $region103: #{tpu_custom_call.1} parent=1 // pred_check_branch
      %2989 = sbr.rel (0) target = $region105
    $region104: #{tpu_custom_call.1} parent=1 // pred_region
      %2990 = dma.done [#allocation4], 32
    $region105: #{tpu_custom_call.1} parent=1 // pred_fallthru
      _
    %2991 = vsyncpa [#allocation3], 1
    %2992 = vsyncpa [#allocation6], 1
    %2993 = vsyncpa [#allocation9], 1
    %2994 = vsyncpa [#allocation12], 1
    %2995 = vsyncpa [#allocation15], 1
    %2996 = vsyncpa [#allocation18], 1
    %2997 = vsyncpa [#allocation21], 1
    %2998 = vsyncpa [#allocation4], 1

</llo_original>
